<compile_context>
chip_gen: v5e
topology: v5e:2x2
jax: 0.10.0
libtpu: 0.0.40
codegen_flags: <defaults>
</compile_context>

<pallas_src>
import jax
import jax.numpy as jnp
from jax.experimental import pallas as pl
from jax.experimental.pallas import tpu as pltpu

LANES = 128


def _round_up(a, b):
    return (a + b - 1) // b * b


def _pad_axis(a, target, axis):
    pad = target - a.shape[axis]
    if pad <= 0:
        return a
    widths = [(0, 0)] * a.ndim
    widths[axis] = (0, pad)
    return jnp.pad(a, widths)


# ----------------------------------------------------------------------------
# Pallas kernels
# ----------------------------------------------------------------------------
def _conv_tanh_pool_kernel(x_ref, w_ref, b_ref, o_ref):
    """x:[4,TM,K] bf16 (4 pool taps), w:[K,128] bf16, b:[1,128] f32,
    o:[TM,128] bf16.

    o = 0.25 * sum_t tanh(x[t] @ w + b)   ==   AvgPool2x2(tanh(conv(x)))

    The four taps are stacked on the sublane (M) axis so the MXU sees one
    [4*TM, K] @ [K, 128] matmul instead of four shallow pushes.
    """
    tm = x_ref.shape[1]
    k = x_ref.shape[2]
    x = x_ref[...].reshape(4 * tm, k)                       # sublane-merge only
    pre = jnp.dot(x, w_ref[...], preferred_element_type=jnp.float32)
    pre = pre + b_ref[...]                                  # single broadcast
    act = jnp.tanh(pre)                                     # (4*TM, 128) f32
    pooled = (act[0 * tm:1 * tm] + act[1 * tm:2 * tm]
              + act[2 * tm:3 * tm] + act[3 * tm:4 * tm])
    o_ref[...] = (0.25 * pooled).astype(o_ref.dtype)


def _tail_kernel(x_ref, w3_ref, b3_ref, w4_ref, b4_ref, w5_ref, b5_ref, o_ref):
    """conv3(+tanh) -> linear1(+tanh) -> linear2 for one batch tile."""
    h = jnp.tanh(
        jnp.dot(x_ref[...], w3_ref[...], preferred_element_type=jnp.float32)
        + b3_ref[...])
    h = jnp.tanh(
        jnp.dot(h.astype(jnp.bfloat16), w4_ref[...],
                preferred_element_type=jnp.float32) + b4_ref[...])
    o_ref[...] = (
        jnp.dot(h.astype(jnp.bfloat16), w5_ref[...],
                preferred_element_type=jnp.float32) + b5_ref[...])


# ----------------------------------------------------------------------------
# Glue: pool-tap-ordered im2col (features ordered (ki, kj, ci)), built in bf16
# ----------------------------------------------------------------------------
def _pool_ordered_patches(x_cl, k):
    """x_cl: (B, H, W, Cin) channels-last bf16, valid channels only.

    Returns patches (4, B*Po*Qo, k*k*Cin): leading axis enumerates the four
    taps (di, dj) of each 2x2 pooling window, rows are (b, po, qo), features
    are ordered (ki, kj, ci) to match the prepared weight matrices.
    """
    B, H, W, Cin = x_cl.shape
    Ho, Wo = H - k + 1, W - k + 1
    Po, Qo = Ho // 2, Wo // 2
    cols = [x_cl[:, ki:ki + Ho, kj:kj + Wo, :]
            for ki in range(k) for kj in range(k)]
    p = jnp.stack(cols, axis=0)                    # (kk, B, Ho, Wo, Cin)
    p = p.reshape(k * k, B, Po, 2, Qo, 2, Cin)     # (kk, B, po, di, qo, dj, c)
    p = p.transpose(3, 5, 1, 2, 4, 0, 6)           # (di, dj, B, po, qo, kk, c)
    p = p.reshape(4, B * Po * Qo, k * k * Cin)
    return p, (B, Po, Qo)


def conv_tanh_pool(x_cl, w_mat, b_row, *, k=5, tile_rows=1024):
    """Fused conv(k=5, s=1, p=0) + tanh + AvgPool2x2.

    x_cl: (B, H, W, Cin) channels-last bf16 (valid channels only).
    Returns (B, Po, Qo, 128) bf16 with channels on the (padded) lane axis.
    """
    patches, (B, Po, Qo) = _pool_ordered_patches(x_cl, k)    # (4, Mp, K) bf16
    Mp = B * Po * Qo
    K = patches.shape[-1]
    # 16-row alignment: safe sublane tiling for bf16 blocks.
    tm = min(tile_rows, _round_up(Mp, 16))
    mp_pad = _round_up(Mp, tm)
    patches = _pad_axis(patches, mp_pad, axis=1)

    out = pl.pallas_call(
        _conv_tanh_pool_kernel,
        out_shape=jax.ShapeDtypeStruct((mp_pad, LANES), jnp.bfloat16),
        grid=(mp_pad // tm,),
        in_specs=[
            pl.BlockSpec((4, tm, K), lambda i: (0, i, 0)),
            pl.BlockSpec((K, LANES), lambda i: (0, 0)),
            pl.BlockSpec((1, LANES), lambda i: (0, 0)),
        ],
        out_specs=pl.BlockSpec((tm, LANES), lambda i: (i, 0)),
        compiler_params=pltpu.CompilerParams(
            dimension_semantics=("parallel",)),
    )(patches, w_mat, b_row)
    return out[:Mp].reshape(B, Po, Qo, LANES)


def lenet_tail(act2, prep, *, tile_batch=512):
    """act2: (B, 5, 5, 16) bf16 -> logits (B, 10).

    conv3 + tanh + flatten + linear1 + tanh + linear2, batch-tiled so the
    x stream is pipelined and VMEM per block stays bounded at any batch size.
    """
    B = act2.shape[0]
    K3 = act2.shape[1] * act2.shape[2] * act2.shape[3]       # 5*5*16 = 400
    x = act2.reshape(B, K3)                                   # bf16 already
    tb = min(tile_batch, _round_up(B, 16))
    bp = _round_up(B, tb)
    x = _pad_axis(x, bp, axis=0)

    out = pl.pallas_call(
        _tail_kernel,
        out_shape=jax.ShapeDtypeStruct((bp, LANES), jnp.float32),
        grid=(bp // tb,),
        in_specs=[
            pl.BlockSpec((tb, K3), lambda i: (i, 0)),
            pl.BlockSpec((K3, LANES), lambda i: (0, 0)),
            pl.BlockSpec((1, LANES), lambda i: (0, 0)),
            pl.BlockSpec((LANES, LANES), lambda i: (0, 0)),
            pl.BlockSpec((1, LANES), lambda i: (0, 0)),
            pl.BlockSpec((LANES, LANES), lambda i: (0, 0)),
            pl.BlockSpec((1, LANES), lambda i: (0, 0)),
        ],
        out_specs=pl.BlockSpec((tb, LANES), lambda i: (i, 0)),
        compiler_params=pltpu.CompilerParams(
            dimension_semantics=("parallel",)),
    )(x, prep["w3"], prep["b3"], prep["w4"], prep["b4"], prep["w5"], prep["b5"])
    return out[:B, :10]


# ----------------------------------------------------------------------------
# Parameters (PyTorch-equivalent init) and weight preparation
# ----------------------------------------------------------------------------
def init_params(key, n_classes=10):
    def uniform(key, shape, fan_in):
        bound = 1.0 / jnp.sqrt(fan_in)
        return jax.random.uniform(key, shape, jnp.float32, -bound, bound)

    ks = jax.random.split(key, 10)
    return {
        "conv1_w": uniform(ks[0], (6, 1, 5, 5), 1 * 25),
        "conv1_b": uniform(ks[1], (6,), 1 * 25),
        "conv2_w": uniform(ks[2], (16, 6, 5, 5), 6 * 25),
        "conv2_b": uniform(ks[3], (16,), 6 * 25),
        "conv3_w": uniform(ks[4], (120, 16, 5, 5), 16 * 25),
        "conv3_b": uniform(ks[5], (120,), 16 * 25),
        "lin1_w": uniform(ks[6], (84, 120), 120),
        "lin1_b": uniform(ks[7], (84,), 120),
        "lin2_w": uniform(ks[8], (n_classes, 84), 84),
        "lin2_b": uniform(ks[9], (n_classes,), 84),
    }


def _conv_weight_matrix(w):
    """(Cout, Cin, k, k) -> (k*k*Cin, 128) bf16, feature order (ki, kj, ci)."""
    Cout, Cin, k, _ = w.shape
    wt = jnp.transpose(w, (2, 3, 1, 0))              # (k, k, Cin, Cout)
    wm = wt.reshape(k * k * Cin, Cout)
    wm = _pad_axis(wm, LANES, axis=1)                # zero-pad output lanes
    return wm.astype(jnp.bfloat16)


def _bias_row(b):
    return _pad_axis(b.reshape(1, -1), LANES, axis=1).astype(jnp.float32)


def _fc_weight_matrix(w_t):
    """(K, N) -> (128, 128) bf16 with the matrix embedded at [:K, :N]."""
    out = jnp.zeros((LANES, LANES), jnp.float32)
    out = out.at[: w_t.shape[0], : w_t.shape[1]].set(w_t)
    return out.astype(jnp.bfloat16)


def prepare_params(p):
    """One-time weight layout prep: transpose/zero-pad to lane-dense matrices."""
    return {
        "w1": _conv_weight_matrix(p["conv1_w"]),     # (25, 128)
        "b1": _bias_row(p["conv1_b"]),
        "w2": _conv_weight_matrix(p["conv2_w"]),     # (150, 128)
        "b2": _bias_row(p["conv2_b"]),
        "w3": _conv_weight_matrix(p["conv3_w"]),     # (400, 128) -- 16 valid Cin
        "b3": _bias_row(p["conv3_b"]),
        "w4": _fc_weight_matrix(p["lin1_w"].T),      # (128, 128)
        "b4": _bias_row(p["lin1_b"]),
        "w5": _fc_weight_matrix(p["lin2_w"].T),      # (128, 128)
        "b5": _bias_row(p["lin2_b"]),
    }


# ----------------------------------------------------------------------------
# LeNet forward
# ----------------------------------------------------------------------------
def lenet_forward(prep, x):
    B, Cin, H, W = x.shape
    # NCHW -> channels-last; Cin == 1 so this is a pure (free) reshape.
    x_cl = x.reshape(B, H, W, Cin).astype(jnp.bfloat16)
    # conv1 + tanh + avgpool (fused)
    a1 = conv_tanh_pool(x_cl, prep["w1"], prep["b1"])          # (B,14,14,128)
    # conv2 + tanh + avgpool (fused); feed only the 6 valid input channels
    a2 = conv_tanh_pool(a1[..., :6], prep["w2"], prep["b2"])   # (B, 5, 5,128)
    # conv3 + tanh + flatten + linear1 + tanh + linear2 (one fused kernel);
    # feed only the 16 valid conv2 channels -> K3 = 400 instead of 3200.
    return lenet_tail(a2[..., :16], prep)                      # (B, 10)


if __name__ == "__main__":
    key = jax.random.PRNGKey(0)
    pkey, xkey = jax.random.split(key)
    params = init_params(pkey)
    prep = prepare_params(params)

    # LeNet expects 32x32 single-channel images (classic padded-MNIST size).
    x = jax.random.normal(xkey, (2, 1, 32, 32), dtype=jnp.float32)

    out = jax.jit(lenet_forward)(prep, x)
    out = jax.block_until_ready(out)
    assert out.shape == (2, 10)
    print("KERNEL_OK")
</pallas_src>

<mosaic_0001>
module attributes {stable_mosaic.version = 11 : i64} {
  func.func @_conv_tanh_pool_kernel(%arg0: i32, %arg1: memref<4x400x25xbf16, #tpu.memory_space<vmem>>, %arg2: memref<25x128xbf16, #tpu.memory_space<vmem>>, %arg3: memref<1x128xf32, #tpu.memory_space<vmem>>, %arg4: memref<400x128xbf16, #tpu.memory_space<vmem>>) attributes {dimension_semantics = [#tpu.dimension_semantics<parallel>], iteration_bounds = array<i64: 1>, scalar_prefetch = 0 : i64, scratch_operands = 0 : i64, tpu.core_type = #tpu.core_type<tc>, window_params = [{transform_indices = @transform_0, window_bounds = array<i64: 4, 400, 25>}, {pipeline_mode = #tpu.pipeline_mode<synchronous>, transform_indices = @transform_1, window_bounds = array<i64: 25, 128>}, {pipeline_mode = #tpu.pipeline_mode<synchronous>, transform_indices = @transform_2, window_bounds = array<i64: 1, 128>}, {transform_indices = @transform_3, window_bounds = array<i64: 400, 128>}]} {
    %c0 = arith.constant 0 : index
    %c0_0 = arith.constant 0 : index
    %c0_1 = arith.constant 0 : index
    %0 = vector.load %arg1[%c0, %c0_0, %c0_1] : memref<4x400x25xbf16, #tpu.memory_space<vmem>>, vector<4x400x25xbf16>
    %1 = vector.shape_cast %0 : vector<4x400x25xbf16> to vector<1600x25xbf16>
    %c0_2 = arith.constant 0 : index
    %c0_3 = arith.constant 0 : index
    %2 = vector.load %arg2[%c0_2, %c0_3] : memref<25x128xbf16, #tpu.memory_space<vmem>>, vector<25x128xbf16>
    %cst = arith.constant dense<0.000000e+00> : vector<1600x128xf32>
    %3 = tpu.matmul %1, %2, %cst {dimension_numbers = #tpu.dot_dimension_numbers<[1], [0], [0], [1], [0, 0, 1, 1], [], []>} : vector<1600x25xbf16>, vector<25x128xbf16>, vector<1600x128xf32> -> vector<1600x128xf32>
    %c0_4 = arith.constant 0 : index
    %c0_5 = arith.constant 0 : index
    %4 = vector.load %arg3[%c0_4, %c0_5] : memref<1x128xf32, #tpu.memory_space<vmem>>, vector<1x128xf32>
    %5 = vector.broadcast %4 : vector<1x128xf32> to vector<1600x128xf32>
    %6 = arith.addf %3, %5 : vector<1600x128xf32>
    %7 = math.tanh %6 : vector<1600x128xf32>
    %8 = vector.extract_strided_slice %7 {offsets = [0, 0], sizes = [400, 128], strides = [1, 1]} : vector<1600x128xf32> to vector<400x128xf32>
    %9 = vector.extract_strided_slice %7 {offsets = [400, 0], sizes = [400, 128], strides = [1, 1]} : vector<1600x128xf32> to vector<400x128xf32>
    %10 = arith.addf %8, %9 : vector<400x128xf32>
    %11 = vector.extract_strided_slice %7 {offsets = [800, 0], sizes = [400, 128], strides = [1, 1]} : vector<1600x128xf32> to vector<400x128xf32>
    %12 = arith.addf %10, %11 : vector<400x128xf32>
    %13 = vector.extract_strided_slice %7 {offsets = [1200, 0], sizes = [400, 128], strides = [1, 1]} : vector<1600x128xf32> to vector<400x128xf32>
    %14 = arith.addf %12, %13 : vector<400x128xf32>
    %cst_6 = arith.constant 2.500000e-01 : f32
    %15 = vector.broadcast %cst_6 : f32 to vector<400x128xf32>
    %16 = arith.mulf %15, %14 : vector<400x128xf32>
    %17 = arith.truncf %16 : vector<400x128xf32> to vector<400x128xbf16>
    %c0_7 = arith.constant 0 : index
    %c0_8 = arith.constant 0 : index
    %18 = vector.load %arg4[%c0_7, %c0_8] : memref<400x128xbf16, #tpu.memory_space<vmem>>, vector<400x128xbf16>
    tpu.vector_store %arg4[%c0_7, %c0_8], %17 {strides = array<i32>} : memref<400x128xbf16, #tpu.memory_space<vmem>>, vector<400x128xbf16>,
    return
  }
  func.func @transform_0(%arg0: i32) -> (i32, i32, i32) {
    %c0_i32 = arith.constant 0 : i32
    %c0_i32_0 = arith.constant 0 : i32
    %c0_i32_1 = arith.constant 0 : i32
    return %c0_i32, %arg0, %c0_i32_0 : i32, i32, i32
  }
  func.func @transform_1(%arg0: i32) -> (i32, i32) {
    %c0_i32 = arith.constant 0 : i32
    %c0_i32_0 = arith.constant 0 : i32
    %c0_i32_1 = arith.constant 0 : i32
    return %c0_i32, %c0_i32_0 : i32, i32
  }
  func.func @transform_2(%arg0: i32) -> (i32, i32) {
    %c0_i32 = arith.constant 0 : i32
    %c0_i32_0 = arith.constant 0 : i32
    %c0_i32_1 = arith.constant 0 : i32
    return %c0_i32, %c0_i32_0 : i32, i32
  }
  func.func @transform_3(%arg0: i32) -> (i32, i32) {
    %c0_i32 = arith.constant 0 : i32
    %c0_i32_0 = arith.constant 0 : i32
    return %arg0, %c0_i32 : i32, i32
  }
}

module attributes {stable_mosaic.version = 11 : i64} {
  func.func @_conv_tanh_pool_kernel(%arg0: i32, %arg1: memref<4x64x150xbf16, #tpu.memory_space<vmem>>, %arg2: memref<150x128xbf16, #tpu.memory_space<vmem>>, %arg3: memref<1x128xf32, #tpu.memory_space<vmem>>, %arg4: memref<64x128xbf16, #tpu.memory_space<vmem>>) attributes {dimension_semantics = [#tpu.dimension_semantics<parallel>], iteration_bounds = array<i64: 1>, scalar_prefetch = 0 : i64, scratch_operands = 0 : i64, tpu.core_type = #tpu.core_type<tc>, window_params = [{transform_indices = @transform_0, window_bounds = array<i64: 4, 64, 150>}, {pipeline_mode = #tpu.pipeline_mode<synchronous>, transform_indices = @transform_1, window_bounds = array<i64: 150, 128>}, {pipeline_mode = #tpu.pipeline_mode<synchronous>, transform_indices = @transform_2, window_bounds = array<i64: 1, 128>}, {transform_indices = @transform_3, window_bounds = array<i64: 64, 128>}]} {
    %c0 = arith.constant 0 : index
    %c0_0 = arith.constant 0 : index
    %c0_1 = arith.constant 0 : index
    %0 = vector.load %arg1[%c0, %c0_0, %c0_1] : memref<4x64x150xbf16, #tpu.memory_space<vmem>>, vector<4x64x150xbf16>
    %1 = vector.shape_cast %0 : vector<4x64x150xbf16> to vector<256x150xbf16>
    %c0_2 = arith.constant 0 : index
    %c0_3 = arith.constant 0 : index
    %2 = vector.load %arg2[%c0_2, %c0_3] : memref<150x128xbf16, #tpu.memory_space<vmem>>, vector<150x128xbf16>
    %cst = arith.constant dense<0.000000e+00> : vector<256x128xf32>
    %3 = tpu.matmul %1, %2, %cst {dimension_numbers = #tpu.dot_dimension_numbers<[1], [0], [0], [1], [0, 0, 1, 1], [], []>} : vector<256x150xbf16>, vector<150x128xbf16>, vector<256x128xf32> -> vector<256x128xf32>
    %c0_4 = arith.constant 0 : index
    %c0_5 = arith.constant 0 : index
    %4 = vector.load %arg3[%c0_4, %c0_5] : memref<1x128xf32, #tpu.memory_space<vmem>>, vector<1x128xf32>
    %5 = vector.broadcast %4 : vector<1x128xf32> to vector<256x128xf32>
    %6 = arith.addf %3, %5 : vector<256x128xf32>
    %7 = math.tanh %6 : vector<256x128xf32>
    %8 = vector.extract_strided_slice %7 {offsets = [0, 0], sizes = [64, 128], strides = [1, 1]} : vector<256x128xf32> to vector<64x128xf32>
    %9 = vector.extract_strided_slice %7 {offsets = [64, 0], sizes = [64, 128], strides = [1, 1]} : vector<256x128xf32> to vector<64x128xf32>
    %10 = arith.addf %8, %9 : vector<64x128xf32>
    %11 = vector.extract_strided_slice %7 {offsets = [128, 0], sizes = [64, 128], strides = [1, 1]} : vector<256x128xf32> to vector<64x128xf32>
    %12 = arith.addf %10, %11 : vector<64x128xf32>
    %13 = vector.extract_strided_slice %7 {offsets = [192, 0], sizes = [64, 128], strides = [1, 1]} : vector<256x128xf32> to vector<64x128xf32>
    %14 = arith.addf %12, %13 : vector<64x128xf32>
    %cst_6 = arith.constant 2.500000e-01 : f32
    %15 = vector.broadcast %cst_6 : f32 to vector<64x128xf32>
    %16 = arith.mulf %15, %14 : vector<64x128xf32>
    %17 = arith.truncf %16 : vector<64x128xf32> to vector<64x128xbf16>
    %c0_7 = arith.constant 0 : index
    %c0_8 = arith.constant 0 : index
    %18 = vector.load %arg4[%c0_7, %c0_8] : memref<64x128xbf16, #tpu.memory_space<vmem>>, vector<64x128xbf16>
    tpu.vector_store %arg4[%c0_7, %c0_8], %17 {strides = array<i32>} : memref<64x128xbf16, #tpu.memory_space<vmem>>, vector<64x128xbf16>,
    return
  }
  func.func @transform_0(%arg0: i32) -> (i32, i32, i32) {
    %c0_i32 = arith.constant 0 : i32
    %c0_i32_0 = arith.constant 0 : i32
    %c0_i32_1 = arith.constant 0 : i32
    return %c0_i32, %arg0, %c0_i32_0 : i32, i32, i32
  }
  func.func @transform_1(%arg0: i32) -> (i32, i32) {
    %c0_i32 = arith.constant 0 : i32
    %c0_i32_0 = arith.constant 0 : i32
    %c0_i32_1 = arith.constant 0 : i32
    return %c0_i32, %c0_i32_0 : i32, i32
  }
  func.func @transform_2(%arg0: i32) -> (i32, i32) {
    %c0_i32 = arith.constant 0 : i32
    %c0_i32_0 = arith.constant 0 : i32
    %c0_i32_1 = arith.constant 0 : i32
    return %c0_i32, %c0_i32_0 : i32, i32
  }
  func.func @transform_3(%arg0: i32) -> (i32, i32) {
    %c0_i32 = arith.constant 0 : i32
    %c0_i32_0 = arith.constant 0 : i32
    return %arg0, %c0_i32 : i32, i32
  }
}

module attributes {stable_mosaic.version = 11 : i64} {
  func.func @_tail_kernel(%arg0: i32, %arg1: memref<16x400xbf16, #tpu.memory_space<vmem>>, %arg2: memref<400x128xbf16, #tpu.memory_space<vmem>>, %arg3: memref<1x128xf32, #tpu.memory_space<vmem>>, %arg4: memref<128x128xbf16, #tpu.memory_space<vmem>>, %arg5: memref<1x128xf32, #tpu.memory_space<vmem>>, %arg6: memref<128x128xbf16, #tpu.memory_space<vmem>>, %arg7: memref<1x128xf32, #tpu.memory_space<vmem>>, %arg8: memref<16x128xf32, #tpu.memory_space<vmem>>) attributes {dimension_semantics = [#tpu.dimension_semantics<parallel>], iteration_bounds = array<i64: 1>, scalar_prefetch = 0 : i64, scratch_operands = 0 : i64, tpu.core_type = #tpu.core_type<tc>, window_params = [{transform_indices = @transform_0, window_bounds = array<i64: 16, 400>}, {pipeline_mode = #tpu.pipeline_mode<synchronous>, transform_indices = @transform_1, window_bounds = array<i64: 400, 128>}, {pipeline_mode = #tpu.pipeline_mode<synchronous>, transform_indices = @transform_2, window_bounds = array<i64: 1, 128>}, {pipeline_mode = #tpu.pipeline_mode<synchronous>, transform_indices = @transform_3, window_bounds = array<i64: 128, 128>}, {pipeline_mode = #tpu.pipeline_mode<synchronous>, transform_indices = @transform_4, window_bounds = array<i64: 1, 128>}, {pipeline_mode = #tpu.pipeline_mode<synchronous>, transform_indices = @transform_5, window_bounds = array<i64: 128, 128>}, {pipeline_mode = #tpu.pipeline_mode<synchronous>, transform_indices = @transform_6, window_bounds = array<i64: 1, 128>}, {transform_indices = @transform_7, window_bounds = array<i64: 16, 128>}]} {
    %c0 = arith.constant 0 : index
    %c0_0 = arith.constant 0 : index
    %0 = vector.load %arg1[%c0, %c0_0] : memref<16x400xbf16, #tpu.memory_space<vmem>>, vector<16x400xbf16>
    %c0_1 = arith.constant 0 : index
    %c0_2 = arith.constant 0 : index
    %1 = vector.load %arg2[%c0_1, %c0_2] : memref<400x128xbf16, #tpu.memory_space<vmem>>, vector<400x128xbf16>
    %cst = arith.constant dense<0.000000e+00> : vector<16x128xf32>
    %2 = tpu.matmul %0, %1, %cst {dimension_numbers = #tpu.dot_dimension_numbers<[1], [0], [0], [1], [0, 0, 1, 1], [], []>} : vector<16x400xbf16>, vector<400x128xbf16>, vector<16x128xf32> -> vector<16x128xf32>
    %c0_3 = arith.constant 0 : index
    %c0_4 = arith.constant 0 : index
    %3 = vector.load %arg3[%c0_3, %c0_4] : memref<1x128xf32, #tpu.memory_space<vmem>>, vector<1x128xf32>
    %4 = vector.broadcast %3 : vector<1x128xf32> to vector<16x128xf32>
    %5 = arith.addf %2, %4 : vector<16x128xf32>
    %6 = math.tanh %5 : vector<16x128xf32>
    %7 = arith.truncf %6 : vector<16x128xf32> to vector<16x128xbf16>
    %c0_5 = arith.constant 0 : index
    %c0_6 = arith.constant 0 : index
    %8 = vector.load %arg4[%c0_5, %c0_6] : memref<128x128xbf16, #tpu.memory_space<vmem>>, vector<128x128xbf16>
    %cst_7 = arith.constant dense<0.000000e+00> : vector<16x128xf32>
    %9 = tpu.matmul %7, %8, %cst_7 {dimension_numbers = #tpu.dot_dimension_numbers<[1], [0], [0], [1], [0, 0, 1, 1], [], []>} : vector<16x128xbf16>, vector<128x128xbf16>, vector<16x128xf32> -> vector<16x128xf32>
    %c0_8 = arith.constant 0 : index
    %c0_9 = arith.constant 0 : index
    %10 = vector.load %arg5[%c0_8, %c0_9] : memref<1x128xf32, #tpu.memory_space<vmem>>, vector<1x128xf32>
    %11 = vector.broadcast %10 : vector<1x128xf32> to vector<16x128xf32>
    %12 = arith.addf %9, %11 : vector<16x128xf32>
    %13 = math.tanh %12 : vector<16x128xf32>
    %14 = arith.truncf %13 : vector<16x128xf32> to vector<16x128xbf16>
    %c0_10 = arith.constant 0 : index
    %c0_11 = arith.constant 0 : index
    %15 = vector.load %arg6[%c0_10, %c0_11] : memref<128x128xbf16, #tpu.memory_space<vmem>>, vector<128x128xbf16>
    %cst_12 = arith.constant dense<0.000000e+00> : vector<16x128xf32>
    %16 = tpu.matmul %14, %15, %cst_12 {dimension_numbers = #tpu.dot_dimension_numbers<[1], [0], [0], [1], [0, 0, 1, 1], [], []>} : vector<16x128xbf16>, vector<128x128xbf16>, vector<16x128xf32> -> vector<16x128xf32>
    %c0_13 = arith.constant 0 : index
    %c0_14 = arith.constant 0 : index
    %17 = vector.load %arg7[%c0_13, %c0_14] : memref<1x128xf32, #tpu.memory_space<vmem>>, vector<1x128xf32>
    %18 = vector.broadcast %17 : vector<1x128xf32> to vector<16x128xf32>
    %19 = arith.addf %16, %18 : vector<16x128xf32>
    %c0_15 = arith.constant 0 : index
    %c0_16 = arith.constant 0 : index
    %20 = vector.load %arg8[%c0_15, %c0_16] : memref<16x128xf32, #tpu.memory_space<vmem>>, vector<16x128xf32>
    tpu.vector_store %arg8[%c0_15, %c0_16], %19 {strides = array<i32>} : memref<16x128xf32, #tpu.memory_space<vmem>>, vector<16x128xf32>,
    return
  }
  func.func @transform_0(%arg0: i32) -> (i32, i32) {
    %c0_i32 = arith.constant 0 : i32
    %c0_i32_0 = arith.constant 0 : i32
    return %arg0, %c0_i32 : i32, i32
  }
  func.func @transform_1(%arg0: i32) -> (i32, i32) {
    %c0_i32 = arith.constant 0 : i32
    %c0_i32_0 = arith.constant 0 : i32
    %c0_i32_1 = arith.constant 0 : i32
    return %c0_i32, %c0_i32_0 : i32, i32
  }
  func.func @transform_2(%arg0: i32) -> (i32, i32) {
    %c0_i32 = arith.constant 0 : i32
    %c0_i32_0 = arith.constant 0 : i32
    %c0_i32_1 = arith.constant 0 : i32
    return %c0_i32, %c0_i32_0 : i32, i32
  }
  func.func @transform_3(%arg0: i32) -> (i32, i32) {
    %c0_i32 = arith.constant 0 : i32
    %c0_i32_0 = arith.constant 0 : i32
    %c0_i32_1 = arith.constant 0 : i32
    return %c0_i32, %c0_i32_0 : i32, i32
  }
  func.func @transform_4(%arg0: i32) -> (i32, i32) {
    %c0_i32 = arith.constant 0 : i32
    %c0_i32_0 = arith.constant 0 : i32
    %c0_i32_1 = arith.constant 0 : i32
    return %c0_i32, %c0_i32_0 : i32, i32
  }
  func.func @transform_5(%arg0: i32) -> (i32, i32) {
    %c0_i32 = arith.constant 0 : i32
    %c0_i32_0 = arith.constant 0 : i32
    %c0_i32_1 = arith.constant 0 : i32
    return %c0_i32, %c0_i32_0 : i32, i32
  }
  func.func @transform_6(%arg0: i32) -> (i32, i32) {
    %c0_i32 = arith.constant 0 : i32
    %c0_i32_0 = arith.constant 0 : i32
    %c0_i32_1 = arith.constant 0 : i32
    return %c0_i32, %c0_i32_0 : i32, i32
  }
  func.func @transform_7(%arg0: i32) -> (i32, i32) {
    %c0_i32 = arith.constant 0 : i32
    %c0_i32_0 = arith.constant 0 : i32
    return %arg0, %c0_i32 : i32, i32
  }
}

</mosaic_0001>

<llo_original>
// kernel: lenet_forward.3
$region0: #{lenet_forward.3}
  #allocation0 [shape = 'u32[]', space=smem, size = 0x4, offset = 0x4, fixed_abs, tag = 'smem constant byte address 0x4 - core index']
  #allocation1 [shape = 'u32[72,128]{1,0:T(1,128)}', space=vmem, size = 0x9000, scoped, tag = 'internal scratch']
  %s0 = inlined_call_operand.vmem [shape: bf16[4,400,25], index: 0, kind: input, shape index: {}]
  %s1 = inlined_call_operand.vmem [shape: bf16[25,128], index: 1, kind: input, shape index: {}]
  %s2 = inlined_call_operand.vmem [shape: f32[1,128], index: 2, kind: input, shape index: {}]
  %s3 = inlined_call_operand.vmem [shape: bf16[400,128], index: 3, kind: output, shape index: {}]
  %s4 = sld [smem:[#allocation0]]
  $region22: #{lenet_forward.3} parent=0
    _
  %s6 = ssub.s32 1, %s4
  %s7 = scalar_select 0, %s6, %s4
  // Predicated region
  $region2: #{lenet_forward.3} parent=0 // pred_check
    _
  $region3: #{lenet_forward.3} parent=0 // pred_check_branch
    %9 = sbr.rel (0) target = $region5
  $region4: #{lenet_forward.3} parent=0 // pred_region
    _
  $region5: #{lenet_forward.3} parent=0 // pred_fallthru
    _
  // Predicated region
  $region6: #{lenet_forward.3} parent=0 // pred_check
    _
  $region7: #{lenet_forward.3} parent=0 // pred_check_branch
    %11 = sbr.rel (0) target = $region9
  $region8: #{lenet_forward.3} parent=0 // pred_region
    _
  $region9: #{lenet_forward.3} parent=0 // pred_fallthru
    _
  // Predicated region
  $region10: #{lenet_forward.3} parent=0 // pred_check
    _
  $region11: #{lenet_forward.3} parent=0 // pred_check_branch
    %13 = sbr.rel (0) target = $region13
  $region12: #{lenet_forward.3} parent=0 // pred_region
    _
  $region13: #{lenet_forward.3} parent=0 // pred_fallthru
    _
  %v15 = vld [vmem:[%s0] sm:$0xf]
  %v16 = vld [vmem:[%s0 + $0x4] sm:$0xf]
  %v17 = vld [vmem:[%s0 + $0x8] sm:$0xf]
  %v18 = vld [vmem:[%s0 + $0xc] sm:$0xf]
  %v19 = vld [vmem:[%s0 + $0x10] sm:$0xf]
  %v20 = vld [vmem:[%s0 + $0x14] sm:$0xf]
  %v21 = vld [vmem:[%s0 + $0x18] sm:$0xf]
  %v22 = vld [vmem:[%s0 + $0x1c] sm:$0xf]
  %v23 = vld [vmem:[%s0 + $0x20] sm:$0xf]
  %v24 = vld [vmem:[%s0 + $0x24] sm:$0xf]
  %v25 = vld [vmem:[%s0 + $0x28] sm:$0xf]
  %v26 = vld [vmem:[%s0 + $0x2c] sm:$0xf]
  %v27 = vld [vmem:[%s0 + $0x30] sm:$0xf]
  %v28 = vld [vmem:[%s0 + $0x34] sm:$0xf]
  %v29 = vld [vmem:[%s0 + $0x38] sm:$0xf]
  %v30 = vld [vmem:[%s0 + $0x3c] sm:$0xf]
  %v31 = vld [vmem:[%s0 + $0x40] sm:$0xf]
  %v32 = vld [vmem:[%s0 + $0x44] sm:$0xf]
  %v33 = vld [vmem:[%s0 + $0x48] sm:$0xf]
  %v34 = vld [vmem:[%s0 + $0x4c] sm:$0xf]
  %v35 = vld [vmem:[%s0 + $0x50] sm:$0xf]
  %v36 = vld [vmem:[%s0 + $0x54] sm:$0xf]
  %v37 = vld [vmem:[%s0 + $0x58] sm:$0xf]
  %v38 = vld [vmem:[%s0 + $0x5c] sm:$0xf]
  %v39 = vld [vmem:[%s0 + $0x60] sm:$0xf]
  %v40 = vld [vmem:[%s0 + $0x64] sm:$0xf]
  %v41 = vld [vmem:[%s0 + $0x68] sm:$0xf]
  %v42 = vld [vmem:[%s0 + $0x6c] sm:$0xf]
  %v43 = vld [vmem:[%s0 + $0x70] sm:$0xf]
  %v44 = vld [vmem:[%s0 + $0x74] sm:$0xf]
  %v45 = vld [vmem:[%s0 + $0x78] sm:$0xf]
  %v46 = vld [vmem:[%s0 + $0x7c] sm:$0xf]
  %v47 = vld [vmem:[%s0 + $0x80] sm:$0xf]
  %v48 = vld [vmem:[%s0 + $0x84] sm:$0xf]
  %v49 = vld [vmem:[%s0 + $0x88] sm:$0xf]
  %v50 = vld [vmem:[%s0 + $0x8c] sm:$0xf]
  %v51 = vld [vmem:[%s0 + $0x90] sm:$0xf]
  %v52 = vld [vmem:[%s0 + $0x94] sm:$0xf]
  %v53 = vld [vmem:[%s0 + $0x98] sm:$0xf]
  %v54 = vld [vmem:[%s0 + $0x9c] sm:$0xf]
  %v55 = vld [vmem:[%s0 + $0xa0] sm:$0xf]
  %v56 = vld [vmem:[%s0 + $0xa4] sm:$0xf]
  %v57 = vld [vmem:[%s0 + $0xa8] sm:$0xf]
  %v58 = vld [vmem:[%s0 + $0xac] sm:$0xf]
  %v59 = vld [vmem:[%s0 + $0xb0] sm:$0xf]
  %v60 = vld [vmem:[%s0 + $0xb4] sm:$0xf]
  %v61 = vld [vmem:[%s0 + $0xb8] sm:$0xf]
  %v62 = vld [vmem:[%s0 + $0xbc] sm:$0xf]
  %v63 = vld [vmem:[%s0 + $0xc0] sm:$0xf]
  %v64 = vld [vmem:[%s0 + $0xc4] sm:$0xf]
  %v65 = vld [vmem:[%s0 + $0xc8] sm:$0xf]
  %v66 = vld [vmem:[%s0 + $0xcc] sm:$0xf]
  %v67 = vld [vmem:[%s0 + $0xd0] sm:$0xf]
  %v68 = vld [vmem:[%s0 + $0xd4] sm:$0xf]
  %v69 = vld [vmem:[%s0 + $0xd8] sm:$0xf]
  %v70 = vld [vmem:[%s0 + $0xdc] sm:$0xf]
  %v71 = vld [vmem:[%s0 + $0xe0] sm:$0xf]
  %v72 = vld [vmem:[%s0 + $0xe4] sm:$0xf]
  %v73 = vld [vmem:[%s0 + $0xe8] sm:$0xf]
  %v74 = vld [vmem:[%s0 + $0xec] sm:$0xf]
  %v75 = vld [vmem:[%s0 + $0xf0] sm:$0xf]
  %v76 = vld [vmem:[%s0 + $0xf4] sm:$0xf]
  %v77 = vld [vmem:[%s0 + $0xf8] sm:$0xf]
  %v78 = vld [vmem:[%s0 + $0xfc] sm:$0xf]
  %v79 = vld [vmem:[%s0 + $0x100] sm:$0xf]
  %v80 = vld [vmem:[%s0 + $0x104] sm:$0xf]
  %v81 = vld [vmem:[%s0 + $0x108] sm:$0xf]
  %v82 = vld [vmem:[%s0 + $0x10c] sm:$0xf]
  %v83 = vld [vmem:[%s0 + $0x110] sm:$0xf]
  %v84 = vld [vmem:[%s0 + $0x114] sm:$0xf]
  %v85 = vld [vmem:[%s0 + $0x118] sm:$0xf]
  %v86 = vld [vmem:[%s0 + $0x11c] sm:$0xf]
  %v87 = vld [vmem:[%s0 + $0x120] sm:$0xf]
  %v88 = vld [vmem:[%s0 + $0x124] sm:$0xf]
  %v89 = vld [vmem:[%s0 + $0x128] sm:$0xf]
  %v90 = vld [vmem:[%s0 + $0x12c] sm:$0xf]
  %v91 = vld [vmem:[%s0 + $0x130] sm:$0xf]
  %v92 = vld [vmem:[%s0 + $0x134] sm:$0xf]
  %v93 = vld [vmem:[%s0 + $0x138] sm:$0xf]
  %v94 = vld [vmem:[%s0 + $0x13c] sm:$0xf]
  %v95 = vld [vmem:[%s0 + $0x140] sm:$0xf]
  %v96 = vld [vmem:[%s0 + $0x144] sm:$0xf]
  %v97 = vld [vmem:[%s0 + $0x148] sm:$0xf]
  %v98 = vld [vmem:[%s0 + $0x14c] sm:$0xf]
  %v99 = vld [vmem:[%s0 + $0x150] sm:$0xf]
  %v100 = vld [vmem:[%s0 + $0x154] sm:$0xf]
  %v101 = vld [vmem:[%s0 + $0x158] sm:$0xf]
  %v102 = vld [vmem:[%s0 + $0x15c] sm:$0xf]
  %v103 = vld [vmem:[%s0 + $0x160] sm:$0xf]
  %v104 = vld [vmem:[%s0 + $0x164] sm:$0xf]
  %v105 = vld [vmem:[%s0 + $0x168] sm:$0xf]
  %v106 = vld [vmem:[%s0 + $0x16c] sm:$0xf]
  %v107 = vld [vmem:[%s0 + $0x170] sm:$0xf]
  %v108 = vld [vmem:[%s0 + $0x174] sm:$0xf]
  %v109 = vld [vmem:[%s0 + $0x178] sm:$0xf]
  %v110 = vld [vmem:[%s0 + $0x17c] sm:$0xf]
  %v111 = vld [vmem:[%s0 + $0x180] sm:$0xf]
  %v112 = vld [vmem:[%s0 + $0x184] sm:$0xf]
  %v113 = vld [vmem:[%s0 + $0x188] sm:$0xf]
  %v114 = vld [vmem:[%s0 + $0x18c] sm:$0xf]
  %v115 = vld [vmem:[%s0 + $0x190] sm:$0xf]
  %v116 = vld [vmem:[%s0 + $0x194] sm:$0xf]
  %v117 = vld [vmem:[%s0 + $0x198] sm:$0xf]
  %v118 = vld [vmem:[%s0 + $0x19c] sm:$0xf]
  %v119 = vld [vmem:[%s0 + $0x1a0] sm:$0xf]
  %v120 = vld [vmem:[%s0 + $0x1a4] sm:$0xf]
  %v121 = vld [vmem:[%s0 + $0x1a8] sm:$0xf]
  %v122 = vld [vmem:[%s0 + $0x1ac] sm:$0xf]
  %v123 = vld [vmem:[%s0 + $0x1b0] sm:$0xf]
  %v124 = vld [vmem:[%s0 + $0x1b4] sm:$0xf]
  %v125 = vld [vmem:[%s0 + $0x1b8] sm:$0xf]
  %v126 = vld [vmem:[%s0 + $0x1bc] sm:$0xf]
  %v127 = vld [vmem:[%s0 + $0x1c0] sm:$0xf]
  %v128 = vld [vmem:[%s0 + $0x1c4] sm:$0xf]
  %v129 = vld [vmem:[%s0 + $0x1c8] sm:$0xf]
  %v130 = vld [vmem:[%s0 + $0x1cc] sm:$0xf]
  %v131 = vld [vmem:[%s0 + $0x1d0] sm:$0xf]
  %v132 = vld [vmem:[%s0 + $0x1d4] sm:$0xf]
  %v133 = vld [vmem:[%s0 + $0x1d8] sm:$0xf]
  %v134 = vld [vmem:[%s0 + $0x1dc] sm:$0xf]
  %v135 = vld [vmem:[%s0 + $0x1e0] sm:$0xf]
  %v136 = vld [vmem:[%s0 + $0x1e4] sm:$0xf]
  %v137 = vld [vmem:[%s0 + $0x1e8] sm:$0xf]
  %v138 = vld [vmem:[%s0 + $0x1ec] sm:$0xf]
  %v139 = vld [vmem:[%s0 + $0x1f0] sm:$0xf]
  %v140 = vld [vmem:[%s0 + $0x1f4] sm:$0xf]
  %v141 = vld [vmem:[%s0 + $0x1f8] sm:$0xf]
  %v142 = vld [vmem:[%s0 + $0x1fc] sm:$0xf]
  %v143 = vld [vmem:[%s0 + $0x200] sm:$0xf]
  %v144 = vld [vmem:[%s0 + $0x204] sm:$0xf]
  %v145 = vld [vmem:[%s0 + $0x208] sm:$0xf]
  %v146 = vld [vmem:[%s0 + $0x20c] sm:$0xf]
  %v147 = vld [vmem:[%s0 + $0x210] sm:$0xf]
  %v148 = vld [vmem:[%s0 + $0x214] sm:$0xf]
  %v149 = vld [vmem:[%s0 + $0x218] sm:$0xf]
  %v150 = vld [vmem:[%s0 + $0x21c] sm:$0xf]
  %v151 = vld [vmem:[%s0 + $0x220] sm:$0xf]
  %v152 = vld [vmem:[%s0 + $0x224] sm:$0xf]
  %v153 = vld [vmem:[%s0 + $0x228] sm:$0xf]
  %v154 = vld [vmem:[%s0 + $0x22c] sm:$0xf]
  %v155 = vld [vmem:[%s0 + $0x230] sm:$0xf]
  %v156 = vld [vmem:[%s0 + $0x234] sm:$0xf]
  %v157 = vld [vmem:[%s0 + $0x238] sm:$0xf]
  %v158 = vld [vmem:[%s0 + $0x23c] sm:$0xf]
  %v159 = vld [vmem:[%s0 + $0x240] sm:$0xf]
  %v160 = vld [vmem:[%s0 + $0x244] sm:$0xf]
  %v161 = vld [vmem:[%s0 + $0x248] sm:$0xf]
  %v162 = vld [vmem:[%s0 + $0x24c] sm:$0xf]
  %v163 = vld [vmem:[%s0 + $0x250] sm:$0xf]
  %v164 = vld [vmem:[%s0 + $0x254] sm:$0xf]
  %v165 = vld [vmem:[%s0 + $0x258] sm:$0xf]
  %v166 = vld [vmem:[%s0 + $0x25c] sm:$0xf]
  %v167 = vld [vmem:[%s0 + $0x260] sm:$0xf]
  %v168 = vld [vmem:[%s0 + $0x264] sm:$0xf]
  %v169 = vld [vmem:[%s0 + $0x268] sm:$0xf]
  %v170 = vld [vmem:[%s0 + $0x26c] sm:$0xf]
  %v171 = vld [vmem:[%s0 + $0x270] sm:$0xf]
  %v172 = vld [vmem:[%s0 + $0x274] sm:$0xf]
  %v173 = vld [vmem:[%s0 + $0x278] sm:$0xf]
  %v174 = vld [vmem:[%s0 + $0x27c] sm:$0xf]
  %v175 = vld [vmem:[%s0 + $0x280] sm:$0xf]
  %v176 = vld [vmem:[%s0 + $0x284] sm:$0xf]
  %v177 = vld [vmem:[%s0 + $0x288] sm:$0xf]
  %v178 = vld [vmem:[%s0 + $0x28c] sm:$0xf]
  %v179 = vld [vmem:[%s0 + $0x290] sm:$0xf]
  %v180 = vld [vmem:[%s0 + $0x294] sm:$0xf]
  %v181 = vld [vmem:[%s0 + $0x298] sm:$0xf]
  %v182 = vld [vmem:[%s0 + $0x29c] sm:$0xf]
  %v183 = vld [vmem:[%s0 + $0x2a0] sm:$0xf]
  %v184 = vld [vmem:[%s0 + $0x2a4] sm:$0xf]
  %v185 = vld [vmem:[%s0 + $0x2a8] sm:$0xf]
  %v186 = vld [vmem:[%s0 + $0x2ac] sm:$0xf]
  %v187 = vld [vmem:[%s0 + $0x2b0] sm:$0xf]
  %v188 = vld [vmem:[%s0 + $0x2b4] sm:$0xf]
  %v189 = vld [vmem:[%s0 + $0x2b8] sm:$0xf]
  %v190 = vld [vmem:[%s0 + $0x2bc] sm:$0xf]
  %v191 = vld [vmem:[%s0 + $0x2c0] sm:$0xf]
  %v192 = vld [vmem:[%s0 + $0x2c4] sm:$0xf]
  %v193 = vld [vmem:[%s0 + $0x2c8] sm:$0xf]
  %v194 = vld [vmem:[%s0 + $0x2cc] sm:$0xf]
  %v195 = vld [vmem:[%s0 + $0x2d0] sm:$0xf]
  %v196 = vld [vmem:[%s0 + $0x2d4] sm:$0xf]
  %v197 = vld [vmem:[%s0 + $0x2d8] sm:$0xf]
  %v198 = vld [vmem:[%s0 + $0x2dc] sm:$0xf]
  %v199 = vld [vmem:[%s0 + $0x2e0] sm:$0xf]
  %v200 = vld [vmem:[%s0 + $0x2e4] sm:$0xf]
  %v201 = vld [vmem:[%s0 + $0x2e8] sm:$0xf]
  %v202 = vld [vmem:[%s0 + $0x2ec] sm:$0xf]
  %v203 = vld [vmem:[%s0 + $0x2f0] sm:$0xf]
  %v204 = vld [vmem:[%s0 + $0x2f4] sm:$0xf]
  %v205 = vld [vmem:[%s0 + $0x2f8] sm:$0xf]
  %v206 = vld [vmem:[%s0 + $0x2fc] sm:$0xf]
  %v207 = vld [vmem:[%s0 + $0x300] sm:$0xf]
  %v208 = vld [vmem:[%s0 + $0x304] sm:$0xf]
  %v209 = vld [vmem:[%s0 + $0x308] sm:$0xf]
  %v210 = vld [vmem:[%s0 + $0x30c] sm:$0xf]
  %v211 = vld [vmem:[%s0 + $0x310] sm:$0xf]
  %v212 = vld [vmem:[%s0 + $0x314] sm:$0xf]
  %v213 = vld [vmem:[%s0 + $0x318] sm:$0xf]
  %v214 = vld [vmem:[%s0 + $0x31c] sm:$0xf]
  %v215 = vld [vmem:[%s1] sm:$0xf]
  %v216 = vld [vmem:[%s1 + $0x4] sm:$0xf]
  %v217 = vld [vmem:[%s1 + $0x8] sm:$0xf]
  %v218 = vld [vmem:[%s1 + $0xc] sm:$0x1]
  %v219 = vld [vmem:[%s2] sm:$0x1]
  %v221 = vperm.slane %v219, 0
  %v423 = vunpack.c.l.b16 %v15
  %v424 = vunpack.c.l.b16 %v16
  %v425 = vunpack.c.l.b16 %v17
  %v426 = vunpack.c.l.b16 %v18
  %v427 = vunpack.c.l.b16 %v19
  %v428 = vunpack.c.l.b16 %v20
  %v429 = vunpack.c.l.b16 %v21
  %v430 = vunpack.c.l.b16 %v22
  %v431 = vunpack.c.l.b16 %v23
  %v432 = vunpack.c.l.b16 %v24
  %v433 = vunpack.c.l.b16 %v25
  %v434 = vunpack.c.l.b16 %v26
  %v435 = vunpack.c.l.b16 %v27
  %v436 = vunpack.c.l.b16 %v28
  %v437 = vunpack.c.l.b16 %v29
  %v438 = vunpack.c.l.b16 %v30
  %v439 = vunpack.c.l.b16 %v31
  %v440 = vunpack.c.l.b16 %v32
  %v441 = vunpack.c.l.b16 %v33
  %v442 = vunpack.c.l.b16 %v34
  %v443 = vunpack.c.l.b16 %v35
  %v444 = vunpack.c.l.b16 %v36
  %v445 = vunpack.c.l.b16 %v37
  %v446 = vunpack.c.l.b16 %v38
  %v447 = vunpack.c.l.b16 %v39
  %v448 = vunpack.c.l.b16 %v40
  %v449 = vunpack.c.l.b16 %v41
  %v450 = vunpack.c.l.b16 %v42
  %v451 = vunpack.c.l.b16 %v43
  %v452 = vunpack.c.l.b16 %v44
  %v453 = vunpack.c.l.b16 %v45
  %v454 = vunpack.c.l.b16 %v46
  %v455 = vunpack.c.l.b16 %v47
  %v456 = vunpack.c.l.b16 %v48
  %v457 = vunpack.c.l.b16 %v49
  %v458 = vunpack.c.l.b16 %v50
  %v459 = vunpack.c.l.b16 %v51
  %v460 = vunpack.c.l.b16 %v52
  %v461 = vunpack.c.l.b16 %v53
  %v462 = vunpack.c.l.b16 %v54
  %v463 = vunpack.c.l.b16 %v55
  %v464 = vunpack.c.l.b16 %v56
  %v465 = vunpack.c.l.b16 %v57
  %v466 = vunpack.c.l.b16 %v58
  %v467 = vunpack.c.l.b16 %v59
  %v468 = vunpack.c.l.b16 %v60
  %v469 = vunpack.c.l.b16 %v61
  %v470 = vunpack.c.l.b16 %v62
  %v471 = vunpack.c.l.b16 %v63
  %v472 = vunpack.c.l.b16 %v64
  %v473 = vunpack.c.l.b16 %v65
  %v474 = vunpack.c.l.b16 %v66
  %v475 = vunpack.c.l.b16 %v67
  %v476 = vunpack.c.l.b16 %v68
  %v477 = vunpack.c.l.b16 %v69
  %v478 = vunpack.c.l.b16 %v70
  %v479 = vunpack.c.l.b16 %v71
  %v480 = vunpack.c.l.b16 %v72
  %v481 = vunpack.c.l.b16 %v73
  %v482 = vunpack.c.l.b16 %v74
  %v483 = vunpack.c.l.b16 %v75
  %v484 = vunpack.c.l.b16 %v76
  %v485 = vunpack.c.l.b16 %v77
  %v486 = vunpack.c.l.b16 %v78
  %v487 = vunpack.c.l.b16 %v79
  %v488 = vunpack.c.l.b16 %v80
  %v489 = vunpack.c.l.b16 %v81
  %v490 = vunpack.c.l.b16 %v82
  %v491 = vunpack.c.l.b16 %v83
  %v492 = vunpack.c.l.b16 %v84
  %v493 = vunpack.c.l.b16 %v85
  %v494 = vunpack.c.l.b16 %v86
  %v495 = vunpack.c.l.b16 %v87
  %v496 = vunpack.c.l.b16 %v88
  %v497 = vunpack.c.l.b16 %v89
  %v498 = vunpack.c.l.b16 %v90
  %v499 = vunpack.c.l.b16 %v91
  %v500 = vunpack.c.l.b16 %v92
  %v501 = vunpack.c.l.b16 %v93
  %v502 = vunpack.c.l.b16 %v94
  %v503 = vunpack.c.l.b16 %v95
  %v504 = vunpack.c.l.b16 %v96
  %v505 = vunpack.c.l.b16 %v97
  %v506 = vunpack.c.l.b16 %v98
  %v507 = vunpack.c.l.b16 %v99
  %v508 = vunpack.c.l.b16 %v100
  %v509 = vunpack.c.l.b16 %v101
  %v510 = vunpack.c.l.b16 %v102
  %v511 = vunpack.c.l.b16 %v103
  %v512 = vunpack.c.l.b16 %v104
  %v513 = vunpack.c.l.b16 %v105
  %v514 = vunpack.c.l.b16 %v106
  %v515 = vunpack.c.l.b16 %v107
  %v516 = vunpack.c.l.b16 %v108
  %v517 = vunpack.c.l.b16 %v109
  %v518 = vunpack.c.l.b16 %v110
  %v519 = vunpack.c.l.b16 %v111
  %v520 = vunpack.c.l.b16 %v112
  %v521 = vunpack.c.l.b16 %v113
  %v522 = vunpack.c.l.b16 %v114
  %v523 = vunpack.c.l.b16 %v115
  %v524 = vunpack.c.l.b16 %v116
  %v525 = vunpack.c.l.b16 %v117
  %v526 = vunpack.c.l.b16 %v118
  %v527 = vunpack.c.l.b16 %v119
  %v528 = vunpack.c.l.b16 %v120
  %v529 = vunpack.c.l.b16 %v121
  %v530 = vunpack.c.l.b16 %v122
  %v531 = vunpack.c.l.b16 %v123
  %v532 = vunpack.c.l.b16 %v124
  %v533 = vunpack.c.l.b16 %v125
  %v534 = vunpack.c.l.b16 %v126
  %v535 = vunpack.c.l.b16 %v127
  %v536 = vunpack.c.l.b16 %v128
  %v537 = vunpack.c.l.b16 %v129
  %v538 = vunpack.c.l.b16 %v130
  %v539 = vunpack.c.l.b16 %v131
  %v540 = vunpack.c.l.b16 %v132
  %v541 = vunpack.c.l.b16 %v133
  %v542 = vunpack.c.l.b16 %v134
  %v543 = vunpack.c.l.b16 %v135
  %v544 = vunpack.c.l.b16 %v136
  %v545 = vunpack.c.l.b16 %v137
  %v546 = vunpack.c.l.b16 %v138
  %v547 = vunpack.c.l.b16 %v139
  %v548 = vunpack.c.l.b16 %v140
  %v549 = vunpack.c.l.b16 %v141
  %v550 = vunpack.c.l.b16 %v142
  %v551 = vunpack.c.l.b16 %v143
  %v552 = vunpack.c.l.b16 %v144
  %v553 = vunpack.c.l.b16 %v145
  %v554 = vunpack.c.l.b16 %v146
  %v555 = vunpack.c.l.b16 %v147
  %v556 = vunpack.c.l.b16 %v148
  %v557 = vunpack.c.l.b16 %v149
  %v558 = vunpack.c.l.b16 %v150
  %v559 = vunpack.c.l.b16 %v151
  %v560 = vunpack.c.l.b16 %v152
  %v561 = vunpack.c.l.b16 %v153
  %v562 = vunpack.c.l.b16 %v154
  %v563 = vunpack.c.l.b16 %v155
  %v564 = vunpack.c.l.b16 %v156
  %v565 = vunpack.c.l.b16 %v157
  %v566 = vunpack.c.l.b16 %v158
  %v567 = vunpack.c.l.b16 %v159
  %v568 = vunpack.c.l.b16 %v160
  %v569 = vunpack.c.l.b16 %v161
  %v570 = vunpack.c.l.b16 %v162
  %v571 = vunpack.c.l.b16 %v163
  %v572 = vunpack.c.l.b16 %v164
  %v573 = vunpack.c.l.b16 %v165
  %v574 = vunpack.c.l.b16 %v166
  %v575 = vunpack.c.l.b16 %v167
  %v576 = vunpack.c.l.b16 %v168
  %v577 = vunpack.c.l.b16 %v169
  %v578 = vunpack.c.l.b16 %v170
  %v579 = vunpack.c.l.b16 %v171
  %v580 = vunpack.c.l.b16 %v172
  %v581 = vunpack.c.l.b16 %v173
  %v582 = vunpack.c.l.b16 %v174
  %v583 = vunpack.c.l.b16 %v175
  %v584 = vunpack.c.l.b16 %v176
  %v585 = vunpack.c.l.b16 %v177
  %v586 = vunpack.c.l.b16 %v178
  %v587 = vunpack.c.l.b16 %v179
  %v588 = vunpack.c.l.b16 %v180
  %v589 = vunpack.c.l.b16 %v181
  %v590 = vunpack.c.l.b16 %v182
  %v591 = vunpack.c.l.b16 %v183
  %v592 = vunpack.c.l.b16 %v184
  %v593 = vunpack.c.l.b16 %v185
  %v594 = vunpack.c.l.b16 %v186
  %v595 = vunpack.c.l.b16 %v187
  %v596 = vunpack.c.l.b16 %v188
  %v597 = vunpack.c.l.b16 %v189
  %v598 = vunpack.c.l.b16 %v190
  %v599 = vunpack.c.l.b16 %v191
  %v600 = vunpack.c.l.b16 %v192
  %v601 = vunpack.c.l.b16 %v193
  %v602 = vunpack.c.l.b16 %v194
  %v603 = vunpack.c.l.b16 %v195
  %v604 = vunpack.c.l.b16 %v196
  %v605 = vunpack.c.l.b16 %v197
  %v606 = vunpack.c.l.b16 %v198
  %v607 = vunpack.c.l.b16 %v199
  %v608 = vunpack.c.l.b16 %v200
  %v609 = vunpack.c.l.b16 %v201
  %v610 = vunpack.c.l.b16 %v202
  %v611 = vunpack.c.l.b16 %v203
  %v612 = vunpack.c.l.b16 %v204
  %v613 = vunpack.c.l.b16 %v205
  %v614 = vunpack.c.l.b16 %v206
  %v615 = vunpack.c.l.b16 %v207
  %v616 = vunpack.c.l.b16 %v208
  %v617 = vunpack.c.l.b16 %v209
  %v618 = vunpack.c.l.b16 %v210
  %v619 = vunpack.c.l.b16 %v211
  %v620 = vunpack.c.l.b16 %v212
  %v621 = vunpack.c.l.b16 %v213
  %v622 = vunpack.c.l.b16 %v214
  %v623 = vpack.c.b16 %v424, %v423
  %v624 = vpack.c.b16 %v426, %v425
  %v625 = vpack.c.b16 %v428, %v427
  %v626 = vpack.c.b16 %v430, %v429
  %v627 = vpack.c.b16 %v432, %v431
  %v628 = vpack.c.b16 %v434, %v433
  %v629 = vpack.c.b16 %v436, %v435
  %v630 = vpack.c.b16 %v438, %v437
  %v631 = vpack.c.b16 %v440, %v439
  %v632 = vpack.c.b16 %v442, %v441
  %v633 = vpack.c.b16 %v444, %v443
  %v634 = vpack.c.b16 %v446, %v445
  %v635 = vpack.c.b16 %v448, %v447
  %v636 = vpack.c.b16 %v450, %v449
  %v637 = vpack.c.b16 %v452, %v451
  %v638 = vpack.c.b16 %v454, %v453
  %v639 = vpack.c.b16 %v456, %v455
  %v640 = vpack.c.b16 %v458, %v457
  %v641 = vpack.c.b16 %v460, %v459
  %v642 = vpack.c.b16 %v462, %v461
  %v643 = vpack.c.b16 %v464, %v463
  %v644 = vpack.c.b16 %v466, %v465
  %v645 = vpack.c.b16 %v468, %v467
  %v646 = vpack.c.b16 %v470, %v469
  %v647 = vpack.c.b16 %v472, %v471
  %v648 = vpack.c.b16 %v474, %v473
  %v649 = vpack.c.b16 %v476, %v475
  %v650 = vpack.c.b16 %v478, %v477
  %v651 = vpack.c.b16 %v480, %v479
  %v652 = vpack.c.b16 %v482, %v481
  %v653 = vpack.c.b16 %v484, %v483
  %v654 = vpack.c.b16 %v486, %v485
  %v655 = vpack.c.b16 %v488, %v487
  %v656 = vpack.c.b16 %v490, %v489
  %v657 = vpack.c.b16 %v492, %v491
  %v658 = vpack.c.b16 %v494, %v493
  %v659 = vpack.c.b16 %v496, %v495
  %v660 = vpack.c.b16 %v498, %v497
  %v661 = vpack.c.b16 %v500, %v499
  %v662 = vpack.c.b16 %v502, %v501
  %v663 = vpack.c.b16 %v504, %v503
  %v664 = vpack.c.b16 %v506, %v505
  %v665 = vpack.c.b16 %v508, %v507
  %v666 = vpack.c.b16 %v510, %v509
  %v667 = vpack.c.b16 %v512, %v511
  %v668 = vpack.c.b16 %v514, %v513
  %v669 = vpack.c.b16 %v516, %v515
  %v670 = vpack.c.b16 %v518, %v517
  %v671 = vpack.c.b16 %v520, %v519
  %v672 = vpack.c.b16 %v522, %v521
  %v673 = vpack.c.b16 %v524, %v523
  %v674 = vpack.c.b16 %v526, %v525
  %v675 = vpack.c.b16 %v528, %v527
  %v676 = vpack.c.b16 %v530, %v529
  %v677 = vpack.c.b16 %v532, %v531
  %v678 = vpack.c.b16 %v534, %v533
  %v679 = vpack.c.b16 %v536, %v535
  %v680 = vpack.c.b16 %v538, %v537
  %v681 = vpack.c.b16 %v540, %v539
  %v682 = vpack.c.b16 %v542, %v541
  %v683 = vpack.c.b16 %v544, %v543
  %v684 = vpack.c.b16 %v546, %v545
  %v685 = vpack.c.b16 %v548, %v547
  %v686 = vpack.c.b16 %v550, %v549
  %v687 = vpack.c.b16 %v552, %v551
  %v688 = vpack.c.b16 %v554, %v553
  %v689 = vpack.c.b16 %v556, %v555
  %v690 = vpack.c.b16 %v558, %v557
  %v691 = vpack.c.b16 %v560, %v559
  %v692 = vpack.c.b16 %v562, %v561
  %v693 = vpack.c.b16 %v564, %v563
  %v694 = vpack.c.b16 %v566, %v565
  %v695 = vpack.c.b16 %v568, %v567
  %v696 = vpack.c.b16 %v570, %v569
  %v697 = vpack.c.b16 %v572, %v571
  %v698 = vpack.c.b16 %v574, %v573
  %v699 = vpack.c.b16 %v576, %v575
  %v700 = vpack.c.b16 %v578, %v577
  %v701 = vpack.c.b16 %v580, %v579
  %v702 = vpack.c.b16 %v582, %v581
  %v703 = vpack.c.b16 %v584, %v583
  %v704 = vpack.c.b16 %v586, %v585
  %v705 = vpack.c.b16 %v588, %v587
  %v706 = vpack.c.b16 %v590, %v589
  %v707 = vpack.c.b16 %v592, %v591
  %v708 = vpack.c.b16 %v594, %v593
  %v709 = vpack.c.b16 %v596, %v595
  %v710 = vpack.c.b16 %v598, %v597
  %v711 = vpack.c.b16 %v600, %v599
  %v712 = vpack.c.b16 %v602, %v601
  %v713 = vpack.c.b16 %v604, %v603
  %v714 = vpack.c.b16 %v606, %v605
  %v715 = vpack.c.b16 %v608, %v607
  %v716 = vpack.c.b16 %v610, %v609
  %v717 = vpack.c.b16 %v612, %v611
  %v718 = vpack.c.b16 %v614, %v613
  %v719 = vpack.c.b16 %v616, %v615
  %v720 = vpack.c.b16 %v618, %v617
  %v721 = vpack.c.b16 %v620, %v619
  %v722 = vpack.c.b16 %v622, %v621
  %v727 = vunpack.c.l.b16 %v215
  %v728 = vunpack.c.l.b16 %v216
  %v729 = vunpack.c.l.b16 %v217
  %v730 = vunpack.c.l.b16 %v218
  %v731 = vpack.c.b16 %v728, %v727
  %v732 = vpack.c.b16 %v730, %v729
  %vm734 = vcmask 203776
  %v736 = vsel %vm734, %v623, 0
  %v739 = vsel %vm734, %v624, 0
  %v742 = vsel %vm734, %v625, 0
  %v745 = vsel %vm734, %v626, 0
  %v748 = vsel %vm734, %v627, 0
  %v751 = vsel %vm734, %v628, 0
  %v754 = vsel %vm734, %v629, 0
  %v757 = vsel %vm734, %v630, 0
  %v760 = vsel %vm734, %v631, 0
  %v763 = vsel %vm734, %v632, 0
  %v766 = vsel %vm734, %v633, 0
  %v769 = vsel %vm734, %v634, 0
  %v772 = vsel %vm734, %v635, 0
  %v775 = vsel %vm734, %v636, 0
  %v778 = vsel %vm734, %v637, 0
  %v781 = vsel %vm734, %v638, 0
  %v784 = vsel %vm734, %v639, 0
  %v787 = vsel %vm734, %v640, 0
  %v790 = vsel %vm734, %v641, 0
  %v793 = vsel %vm734, %v642, 0
  %v796 = vsel %vm734, %v643, 0
  %v799 = vsel %vm734, %v644, 0
  %v802 = vsel %vm734, %v645, 0
  %v805 = vsel %vm734, %v646, 0
  %v808 = vsel %vm734, %v647, 0
  %v811 = vsel %vm734, %v648, 0
  %v814 = vsel %vm734, %v649, 0
  %v817 = vsel %vm734, %v650, 0
  %v820 = vsel %vm734, %v651, 0
  %v823 = vsel %vm734, %v652, 0
  %v826 = vsel %vm734, %v653, 0
  %v829 = vsel %vm734, %v654, 0
  %v832 = vsel %vm734, %v655, 0
  %v835 = vsel %vm734, %v656, 0
  %v838 = vsel %vm734, %v657, 0
  %v841 = vsel %vm734, %v658, 0
  %v844 = vsel %vm734, %v659, 0
  %v847 = vsel %vm734, %v660, 0
  %v850 = vsel %vm734, %v661, 0
  %v853 = vsel %vm734, %v662, 0
  %v856 = vsel %vm734, %v663, 0
  %v859 = vsel %vm734, %v664, 0
  %v862 = vsel %vm734, %v665, 0
  %v865 = vsel %vm734, %v666, 0
  %v868 = vsel %vm734, %v667, 0
  %v871 = vsel %vm734, %v668, 0
  %v874 = vsel %vm734, %v669, 0
  %v877 = vsel %vm734, %v670, 0
  %v880 = vsel %vm734, %v671, 0
  %v883 = vsel %vm734, %v672, 0
  %v886 = vsel %vm734, %v673, 0
  %v889 = vsel %vm734, %v674, 0
  %v892 = vsel %vm734, %v675, 0
  %v895 = vsel %vm734, %v676, 0
  %v898 = vsel %vm734, %v677, 0
  %v901 = vsel %vm734, %v678, 0
  %v904 = vsel %vm734, %v679, 0
  %v907 = vsel %vm734, %v680, 0
  %v910 = vsel %vm734, %v681, 0
  %v913 = vsel %vm734, %v682, 0
  %v916 = vsel %vm734, %v683, 0
  %v919 = vsel %vm734, %v684, 0
  %v922 = vsel %vm734, %v685, 0
  %v925 = vsel %vm734, %v686, 0
  %v928 = vsel %vm734, %v687, 0
  %v931 = vsel %vm734, %v688, 0
  %v934 = vsel %vm734, %v689, 0
  %v937 = vsel %vm734, %v690, 0
  %v940 = vsel %vm734, %v691, 0
  %v943 = vsel %vm734, %v692, 0
  %v946 = vsel %vm734, %v693, 0
  %v949 = vsel %vm734, %v694, 0
  %v952 = vsel %vm734, %v695, 0
  %v955 = vsel %vm734, %v696, 0
  %v958 = vsel %vm734, %v697, 0
  %v961 = vsel %vm734, %v698, 0
  %v964 = vsel %vm734, %v699, 0
  %v967 = vsel %vm734, %v700, 0
  %v970 = vsel %vm734, %v701, 0
  %v973 = vsel %vm734, %v702, 0
  %v976 = vsel %vm734, %v703, 0
  %v979 = vsel %vm734, %v704, 0
  %v982 = vsel %vm734, %v705, 0
  %v985 = vsel %vm734, %v706, 0
  %v988 = vsel %vm734, %v707, 0
  %v991 = vsel %vm734, %v708, 0
  %v994 = vsel %vm734, %v709, 0
  %v997 = vsel %vm734, %v710, 0
  %v1000 = vsel %vm734, %v711, 0
  %v1003 = vsel %vm734, %v712, 0
  %v1006 = vsel %vm734, %v713, 0
  %v1009 = vsel %vm734, %v714, 0
  %v1012 = vsel %vm734, %v715, 0
  %v1015 = vsel %vm734, %v716, 0
  %v1018 = vsel %vm734, %v717, 0
  %v1021 = vsel %vm734, %v718, 0
  %v1024 = vsel %vm734, %v719, 0
  %v1027 = vsel %vm734, %v720, 0
  %v1030 = vsel %vm734, %v721, 0
  %v1033 = vsel %vm734, %v722, 0
  %vm1035 = vcmask 1043456
  %vm1036 = vcmask 1044480
  %v1037 = vsel %vm1035, 4294967295, 65535
  %v1038 = vsel %vm1036, %v1037, 0
  %v1040 = vand.u32 %v732, %v1038
  %1042 = vmatpush.bf16.msra.mxu0 0
  %1043 = vmatpush.bf16.msra.mxu0 0
  %1044 = vmatpush.bf16.msra.mxu0 0
  %1045 = vmatpush.bf16.msra.mxu0 0
  %1046 = vmatpush.bf16.msra.mxu0 0
  %1047 = vmatpush.bf16.msra.mxu0 0
  %1048 = vmatpush.bf16.msra.mxu0 %v1040
  %1049 = vmatpush.bf16.msra.mxu0 %v731
  %1050 = vmatmul.bf16.gmra.mxu0 %v736
  %v1051 = vpop.f32.mrf.mxu0
  %v1052 = vadd.f32 %v221, %v1051
  %v1053 = vpop.f32.mrf.mxu0
  %v1054 = vadd.f32 %v221, %v1053
  %1055 = vmatmul.bf16.gmra.mxu0 %v739
  %v1056 = vpop.f32.mrf.mxu0
  %v1057 = vadd.f32 %v221, %v1056
  %v1058 = vpop.f32.mrf.mxu0
  %v1059 = vadd.f32 %v221, %v1058
  %1060 = vmatmul.bf16.gmra.mxu0 %v742
  %v1061 = vpop.f32.mrf.mxu0
  %v1062 = vadd.f32 %v221, %v1061
  %v1063 = vpop.f32.mrf.mxu0
  %v1064 = vadd.f32 %v221, %v1063
  %1065 = vmatmul.bf16.gmra.mxu0 %v745
  %v1066 = vpop.f32.mrf.mxu0
  %v1067 = vadd.f32 %v221, %v1066
  %v1068 = vpop.f32.mrf.mxu0
  %v1069 = vadd.f32 %v221, %v1068
  %1070 = vmatmul.bf16.gmra.mxu0 %v748
  %v1071 = vpop.f32.mrf.mxu0
  %v1072 = vadd.f32 %v221, %v1071
  %v1073 = vpop.f32.mrf.mxu0
  %v1074 = vadd.f32 %v221, %v1073
  %1075 = vmatmul.bf16.gmra.mxu0 %v751
  %v1076 = vpop.f32.mrf.mxu0
  %v1077 = vadd.f32 %v221, %v1076
  %v1078 = vpop.f32.mrf.mxu0
  %v1079 = vadd.f32 %v221, %v1078
  %1080 = vmatmul.bf16.gmra.mxu0 %v754
  %v1081 = vpop.f32.mrf.mxu0
  %v1082 = vadd.f32 %v221, %v1081
  %v1083 = vpop.f32.mrf.mxu0
  %v1084 = vadd.f32 %v221, %v1083
  %1085 = vmatmul.bf16.gmra.mxu0 %v757
  %v1086 = vpop.f32.mrf.mxu0
  %v1087 = vadd.f32 %v221, %v1086
  %v1088 = vpop.f32.mrf.mxu0
  %v1089 = vadd.f32 %v221, %v1088
  %1090 = vmatmul.bf16.gmra.mxu0 %v760
  %v1091 = vpop.f32.mrf.mxu0
  %v1092 = vadd.f32 %v221, %v1091
  %v1093 = vpop.f32.mrf.mxu0
  %v1094 = vadd.f32 %v221, %v1093
  %1095 = vmatmul.bf16.gmra.mxu0 %v763
  %v1096 = vpop.f32.mrf.mxu0
  %v1097 = vadd.f32 %v221, %v1096
  %v1098 = vpop.f32.mrf.mxu0
  %v1099 = vadd.f32 %v221, %v1098
  %1100 = vmatmul.bf16.gmra.mxu0 %v766
  %v1101 = vpop.f32.mrf.mxu0
  %v1102 = vadd.f32 %v221, %v1101
  %v1103 = vpop.f32.mrf.mxu0
  %v1104 = vadd.f32 %v221, %v1103
  %1105 = vmatmul.bf16.gmra.mxu0 %v769
  %v1106 = vpop.f32.mrf.mxu0
  %v1107 = vadd.f32 %v221, %v1106
  %v1108 = vpop.f32.mrf.mxu0
  %v1109 = vadd.f32 %v221, %v1108
  %1110 = vmatmul.bf16.gmra.mxu0 %v772
  %v1111 = vpop.f32.mrf.mxu0
  %v1112 = vadd.f32 %v221, %v1111
  %v1113 = vpop.f32.mrf.mxu0
  %v1114 = vadd.f32 %v221, %v1113
  %1115 = vmatmul.bf16.gmra.mxu0 %v775
  %v1116 = vpop.f32.mrf.mxu0
  %v1117 = vadd.f32 %v221, %v1116
  %v1118 = vpop.f32.mrf.mxu0
  %v1119 = vadd.f32 %v221, %v1118
  %1120 = vmatmul.bf16.gmra.mxu0 %v778
  %v1121 = vpop.f32.mrf.mxu0
  %v1122 = vadd.f32 %v221, %v1121
  %v1123 = vpop.f32.mrf.mxu0
  %v1124 = vadd.f32 %v221, %v1123
  %1125 = vmatmul.bf16.gmra.mxu0 %v781
  %v1126 = vpop.f32.mrf.mxu0
  %v1127 = vadd.f32 %v221, %v1126
  %v1128 = vpop.f32.mrf.mxu0
  %v1129 = vadd.f32 %v221, %v1128
  %1130 = vmatmul.bf16.gmra.mxu0 %v784
  %v1131 = vpop.f32.mrf.mxu0
  %v1132 = vadd.f32 %v221, %v1131
  %v1133 = vpop.f32.mrf.mxu0
  %v1134 = vadd.f32 %v221, %v1133
  %1135 = vmatmul.bf16.gmra.mxu0 %v787
  %v1136 = vpop.f32.mrf.mxu0
  %v1137 = vadd.f32 %v221, %v1136
  %v1138 = vpop.f32.mrf.mxu0
  %v1139 = vadd.f32 %v221, %v1138
  %1140 = vmatmul.bf16.gmra.mxu0 %v790
  %v1141 = vpop.f32.mrf.mxu0
  %v1142 = vadd.f32 %v221, %v1141
  %v1143 = vpop.f32.mrf.mxu0
  %v1144 = vadd.f32 %v221, %v1143
  %1145 = vmatmul.bf16.gmra.mxu0 %v793
  %v1146 = vpop.f32.mrf.mxu0
  %v1147 = vadd.f32 %v221, %v1146
  %v1148 = vpop.f32.mrf.mxu0
  %v1149 = vadd.f32 %v221, %v1148
  %1150 = vmatmul.bf16.gmra.mxu0 %v796
  %v1151 = vpop.f32.mrf.mxu0
  %v1152 = vadd.f32 %v221, %v1151
  %v1153 = vpop.f32.mrf.mxu0
  %v1154 = vadd.f32 %v221, %v1153
  %1155 = vmatmul.bf16.gmra.mxu0 %v799
  %v1156 = vpop.f32.mrf.mxu0
  %v1157 = vadd.f32 %v221, %v1156
  %v1158 = vpop.f32.mrf.mxu0
  %v1159 = vadd.f32 %v221, %v1158
  %1160 = vmatmul.bf16.gmra.mxu0 %v802
  %v1161 = vpop.f32.mrf.mxu0
  %v1162 = vadd.f32 %v221, %v1161
  %v1163 = vpop.f32.mrf.mxu0
  %v1164 = vadd.f32 %v221, %v1163
  %1165 = vmatmul.bf16.gmra.mxu0 %v805
  %v1166 = vpop.f32.mrf.mxu0
  %v1167 = vadd.f32 %v221, %v1166
  %v1168 = vpop.f32.mrf.mxu0
  %v1169 = vadd.f32 %v221, %v1168
  %1170 = vmatmul.bf16.gmra.mxu0 %v808
  %v1171 = vpop.f32.mrf.mxu0
  %v1172 = vadd.f32 %v221, %v1171
  %v1173 = vpop.f32.mrf.mxu0
  %v1174 = vadd.f32 %v221, %v1173
  %1175 = vmatmul.bf16.gmra.mxu0 %v811
  %v1176 = vpop.f32.mrf.mxu0
  %v1177 = vadd.f32 %v221, %v1176
  %v1178 = vpop.f32.mrf.mxu0
  %v1179 = vadd.f32 %v221, %v1178
  %1180 = vmatmul.bf16.gmra.mxu0 %v814
  %v1181 = vpop.f32.mrf.mxu0
  %v1182 = vadd.f32 %v221, %v1181
  %v1183 = vpop.f32.mrf.mxu0
  %v1184 = vadd.f32 %v221, %v1183
  %1185 = vmatmul.bf16.gmra.mxu0 %v817
  %v1186 = vpop.f32.mrf.mxu0
  %v1187 = vadd.f32 %v221, %v1186
  %v1188 = vpop.f32.mrf.mxu0
  %v1189 = vadd.f32 %v221, %v1188
  %1190 = vmatmul.bf16.gmra.mxu0 %v820
  %v1191 = vpop.f32.mrf.mxu0
  %v1192 = vadd.f32 %v221, %v1191
  %v1193 = vpop.f32.mrf.mxu0
  %v1194 = vadd.f32 %v221, %v1193
  %1195 = vmatmul.bf16.gmra.mxu0 %v823
  %v1196 = vpop.f32.mrf.mxu0
  %v1197 = vadd.f32 %v221, %v1196
  %v1198 = vpop.f32.mrf.mxu0
  %v1199 = vadd.f32 %v221, %v1198
  %1200 = vmatmul.bf16.gmra.mxu0 %v826
  %v1201 = vpop.f32.mrf.mxu0
  %v1202 = vadd.f32 %v221, %v1201
  %v1203 = vpop.f32.mrf.mxu0
  %v1204 = vadd.f32 %v221, %v1203
  %1205 = vmatmul.bf16.gmra.mxu0 %v829
  %v1206 = vpop.f32.mrf.mxu0
  %v1207 = vadd.f32 %v221, %v1206
  %v1208 = vpop.f32.mrf.mxu0
  %v1209 = vadd.f32 %v221, %v1208
  %1210 = vmatmul.bf16.gmra.mxu0 %v832
  %v1211 = vpop.f32.mrf.mxu0
  %v1212 = vadd.f32 %v221, %v1211
  %v1213 = vpop.f32.mrf.mxu0
  %v1214 = vadd.f32 %v221, %v1213
  %1215 = vmatmul.bf16.gmra.mxu0 %v835
  %v1216 = vpop.f32.mrf.mxu0
  %v1217 = vadd.f32 %v221, %v1216
  %v1218 = vpop.f32.mrf.mxu0
  %v1219 = vadd.f32 %v221, %v1218
  %1220 = vmatmul.bf16.gmra.mxu0 %v838
  %v1221 = vpop.f32.mrf.mxu0
  %v1222 = vadd.f32 %v221, %v1221
  %v1223 = vpop.f32.mrf.mxu0
  %v1224 = vadd.f32 %v221, %v1223
  %1225 = vmatmul.bf16.gmra.mxu0 %v841
  %v1226 = vpop.f32.mrf.mxu0
  %v1227 = vadd.f32 %v221, %v1226
  %v1228 = vpop.f32.mrf.mxu0
  %v1229 = vadd.f32 %v221, %v1228
  %1230 = vmatmul.bf16.gmra.mxu0 %v844
  %v1231 = vpop.f32.mrf.mxu0
  %v1232 = vadd.f32 %v221, %v1231
  %v1233 = vpop.f32.mrf.mxu0
  %v1234 = vadd.f32 %v221, %v1233
  %1235 = vmatmul.bf16.gmra.mxu0 %v847
  %v1236 = vpop.f32.mrf.mxu0
  %v1237 = vadd.f32 %v221, %v1236
  %v1238 = vpop.f32.mrf.mxu0
  %v1239 = vadd.f32 %v221, %v1238
  %1240 = vmatmul.bf16.gmra.mxu0 %v850
  %v1241 = vpop.f32.mrf.mxu0
  %v1242 = vadd.f32 %v221, %v1241
  %v1243 = vpop.f32.mrf.mxu0
  %v1244 = vadd.f32 %v221, %v1243
  %1245 = vmatmul.bf16.gmra.mxu0 %v853
  %v1246 = vpop.f32.mrf.mxu0
  %v1247 = vadd.f32 %v221, %v1246
  %v1248 = vpop.f32.mrf.mxu0
  %v1249 = vadd.f32 %v221, %v1248
  %1250 = vmatmul.bf16.gmra.mxu0 %v856
  %v1251 = vpop.f32.mrf.mxu0
  %v1252 = vadd.f32 %v221, %v1251
  %v1253 = vpop.f32.mrf.mxu0
  %v1254 = vadd.f32 %v221, %v1253
  %1255 = vmatmul.bf16.gmra.mxu0 %v859
  %v1256 = vpop.f32.mrf.mxu0
  %v1257 = vadd.f32 %v221, %v1256
  %v1258 = vpop.f32.mrf.mxu0
  %v1259 = vadd.f32 %v221, %v1258
  %1260 = vmatmul.bf16.gmra.mxu0 %v862
  %v1261 = vpop.f32.mrf.mxu0
  %v1262 = vadd.f32 %v221, %v1261
  %v1263 = vpop.f32.mrf.mxu0
  %v1264 = vadd.f32 %v221, %v1263
  %1265 = vmatmul.bf16.gmra.mxu0 %v865
  %v1266 = vpop.f32.mrf.mxu0
  %v1267 = vadd.f32 %v221, %v1266
  %v1268 = vpop.f32.mrf.mxu0
  %v1269 = vadd.f32 %v221, %v1268
  %1270 = vmatmul.bf16.gmra.mxu0 %v868
  %v1271 = vpop.f32.mrf.mxu0
  %v1272 = vadd.f32 %v221, %v1271
  %v1273 = vpop.f32.mrf.mxu0
  %v1274 = vadd.f32 %v221, %v1273
  %1275 = vmatmul.bf16.gmra.mxu0 %v871
  %v1276 = vpop.f32.mrf.mxu0
  %v1277 = vadd.f32 %v221, %v1276
  %v1278 = vpop.f32.mrf.mxu0
  %v1279 = vadd.f32 %v221, %v1278
  %1280 = vmatmul.bf16.gmra.mxu0 %v874
  %v1281 = vpop.f32.mrf.mxu0
  %v1282 = vadd.f32 %v221, %v1281
  %v1283 = vpop.f32.mrf.mxu0
  %v1284 = vadd.f32 %v221, %v1283
  %1285 = vmatmul.bf16.gmra.mxu0 %v877
  %v1286 = vpop.f32.mrf.mxu0
  %v1287 = vadd.f32 %v221, %v1286
  %v1288 = vpop.f32.mrf.mxu0
  %v1289 = vadd.f32 %v221, %v1288
  %1290 = vmatmul.bf16.gmra.mxu0 %v880
  %v1291 = vpop.f32.mrf.mxu0
  %v1292 = vadd.f32 %v221, %v1291
  %v1293 = vpop.f32.mrf.mxu0
  %v1294 = vadd.f32 %v221, %v1293
  %1295 = vmatmul.bf16.gmra.mxu0 %v883
  %v1296 = vpop.f32.mrf.mxu0
  %v1297 = vadd.f32 %v221, %v1296
  %v1298 = vpop.f32.mrf.mxu0
  %v1299 = vadd.f32 %v221, %v1298
  %1300 = vmatmul.bf16.gmra.mxu0 %v886
  %v1301 = vpop.f32.mrf.mxu0
  %v1302 = vadd.f32 %v221, %v1301
  %v1303 = vpop.f32.mrf.mxu0
  %v1304 = vadd.f32 %v221, %v1303
  %1305 = vmatmul.bf16.gmra.mxu0 %v889
  %v1306 = vpop.f32.mrf.mxu0
  %v1307 = vadd.f32 %v221, %v1306
  %v1308 = vpop.f32.mrf.mxu0
  %v1309 = vadd.f32 %v221, %v1308
  %1310 = vmatmul.bf16.gmra.mxu0 %v892
  %v1311 = vpop.f32.mrf.mxu0
  %v1312 = vadd.f32 %v221, %v1311
  %v1313 = vpop.f32.mrf.mxu0
  %v1314 = vadd.f32 %v221, %v1313
  %1315 = vmatmul.bf16.gmra.mxu0 %v895
  %v1316 = vpop.f32.mrf.mxu0
  %v1317 = vadd.f32 %v221, %v1316
  %v1318 = vpop.f32.mrf.mxu0
  %v1319 = vadd.f32 %v221, %v1318
  %1320 = vmatmul.bf16.gmra.mxu0 %v898
  %v1321 = vpop.f32.mrf.mxu0
  %v1322 = vadd.f32 %v221, %v1321
  %v1323 = vpop.f32.mrf.mxu0
  %v1324 = vadd.f32 %v221, %v1323
  %1325 = vmatmul.bf16.gmra.mxu0 %v901
  %v1326 = vpop.f32.mrf.mxu0
  %v1327 = vadd.f32 %v221, %v1326
  %v1328 = vpop.f32.mrf.mxu0
  %v1329 = vadd.f32 %v221, %v1328
  %1330 = vmatmul.bf16.gmra.mxu0 %v904
  %v1331 = vpop.f32.mrf.mxu0
  %v1332 = vadd.f32 %v221, %v1331
  %v1333 = vpop.f32.mrf.mxu0
  %v1334 = vadd.f32 %v221, %v1333
  %1335 = vmatmul.bf16.gmra.mxu0 %v907
  %v1336 = vpop.f32.mrf.mxu0
  %v1337 = vadd.f32 %v221, %v1336
  %v1338 = vpop.f32.mrf.mxu0
  %v1339 = vadd.f32 %v221, %v1338
  %1340 = vmatmul.bf16.gmra.mxu0 %v910
  %v1341 = vpop.f32.mrf.mxu0
  %v1342 = vadd.f32 %v221, %v1341
  %v1343 = vpop.f32.mrf.mxu0
  %v1344 = vadd.f32 %v221, %v1343
  %1345 = vmatmul.bf16.gmra.mxu0 %v913
  %v1346 = vpop.f32.mrf.mxu0
  %v1347 = vadd.f32 %v221, %v1346
  %v1348 = vpop.f32.mrf.mxu0
  %v1349 = vadd.f32 %v221, %v1348
  %1350 = vmatmul.bf16.gmra.mxu0 %v916
  %v1351 = vpop.f32.mrf.mxu0
  %v1352 = vadd.f32 %v221, %v1351
  %v1353 = vpop.f32.mrf.mxu0
  %v1354 = vadd.f32 %v221, %v1353
  %1355 = vmatmul.bf16.gmra.mxu0 %v919
  %v1356 = vpop.f32.mrf.mxu0
  %v1357 = vadd.f32 %v221, %v1356
  %v1358 = vpop.f32.mrf.mxu0
  %v1359 = vadd.f32 %v221, %v1358
  %1360 = vmatmul.bf16.gmra.mxu0 %v922
  %v1361 = vpop.f32.mrf.mxu0
  %v1362 = vadd.f32 %v221, %v1361
  %v1363 = vpop.f32.mrf.mxu0
  %v1364 = vadd.f32 %v221, %v1363
  %1365 = vmatmul.bf16.gmra.mxu0 %v925
  %v1366 = vpop.f32.mrf.mxu0
  %v1367 = vadd.f32 %v221, %v1366
  %v1368 = vpop.f32.mrf.mxu0
  %v1369 = vadd.f32 %v221, %v1368
  %1370 = vmatmul.bf16.gmra.mxu0 %v928
  %v1371 = vpop.f32.mrf.mxu0
  %v1372 = vadd.f32 %v221, %v1371
  %v1373 = vpop.f32.mrf.mxu0
  %v1374 = vadd.f32 %v221, %v1373
  %1375 = vmatmul.bf16.gmra.mxu0 %v931
  %v1376 = vpop.f32.mrf.mxu0
  %v1377 = vadd.f32 %v221, %v1376
  %v1378 = vpop.f32.mrf.mxu0
  %v1379 = vadd.f32 %v221, %v1378
  %1380 = vmatmul.bf16.gmra.mxu0 %v934
  %v1381 = vpop.f32.mrf.mxu0
  %v1382 = vadd.f32 %v221, %v1381
  %v1383 = vpop.f32.mrf.mxu0
  %v1384 = vadd.f32 %v221, %v1383
  %1385 = vmatmul.bf16.gmra.mxu0 %v937
  %v1386 = vpop.f32.mrf.mxu0
  %v1387 = vadd.f32 %v221, %v1386
  %v1388 = vpop.f32.mrf.mxu0
  %v1389 = vadd.f32 %v221, %v1388
  %1390 = vmatmul.bf16.gmra.mxu0 %v940
  %v1391 = vpop.f32.mrf.mxu0
  %v1392 = vadd.f32 %v221, %v1391
  %v1393 = vpop.f32.mrf.mxu0
  %v1394 = vadd.f32 %v221, %v1393
  %1395 = vmatmul.bf16.gmra.mxu0 %v943
  %v1396 = vpop.f32.mrf.mxu0
  %v1397 = vadd.f32 %v221, %v1396
  %v1398 = vpop.f32.mrf.mxu0
  %v1399 = vadd.f32 %v221, %v1398
  %1400 = vmatmul.bf16.gmra.mxu0 %v946
  %v1401 = vpop.f32.mrf.mxu0
  %v1402 = vadd.f32 %v221, %v1401
  %v1403 = vpop.f32.mrf.mxu0
  %v1404 = vadd.f32 %v221, %v1403
  %1405 = vmatmul.bf16.gmra.mxu0 %v949
  %v1406 = vpop.f32.mrf.mxu0
  %v1407 = vadd.f32 %v221, %v1406
  %v1408 = vpop.f32.mrf.mxu0
  %v1409 = vadd.f32 %v221, %v1408
  %1410 = vmatmul.bf16.gmra.mxu0 %v952
  %v1411 = vpop.f32.mrf.mxu0
  %v1412 = vadd.f32 %v221, %v1411
  %v1413 = vpop.f32.mrf.mxu0
  %v1414 = vadd.f32 %v221, %v1413
  %1415 = vmatmul.bf16.gmra.mxu0 %v955
  %v1416 = vpop.f32.mrf.mxu0
  %v1417 = vadd.f32 %v221, %v1416
  %v1418 = vpop.f32.mrf.mxu0
  %v1419 = vadd.f32 %v221, %v1418
  %1420 = vmatmul.bf16.gmra.mxu0 %v958
  %v1421 = vpop.f32.mrf.mxu0
  %v1422 = vadd.f32 %v221, %v1421
  %v1423 = vpop.f32.mrf.mxu0
  %v1424 = vadd.f32 %v221, %v1423
  %1425 = vmatmul.bf16.gmra.mxu0 %v961
  %v1426 = vpop.f32.mrf.mxu0
  %v1427 = vadd.f32 %v221, %v1426
  %v1428 = vpop.f32.mrf.mxu0
  %v1429 = vadd.f32 %v221, %v1428
  %1430 = vmatmul.bf16.gmra.mxu0 %v964
  %v1431 = vpop.f32.mrf.mxu0
  %v1432 = vadd.f32 %v221, %v1431
  %v1433 = vpop.f32.mrf.mxu0
  %v1434 = vadd.f32 %v221, %v1433
  %1435 = vmatmul.bf16.gmra.mxu0 %v967
  %v1436 = vpop.f32.mrf.mxu0
  %v1437 = vadd.f32 %v221, %v1436
  %v1438 = vpop.f32.mrf.mxu0
  %v1439 = vadd.f32 %v221, %v1438
  %1440 = vmatmul.bf16.gmra.mxu0 %v970
  %v1441 = vpop.f32.mrf.mxu0
  %v1442 = vadd.f32 %v221, %v1441
  %v1443 = vpop.f32.mrf.mxu0
  %v1444 = vadd.f32 %v221, %v1443
  %1445 = vmatmul.bf16.gmra.mxu0 %v973
  %v1446 = vpop.f32.mrf.mxu0
  %v1447 = vadd.f32 %v221, %v1446
  %v1448 = vpop.f32.mrf.mxu0
  %v1449 = vadd.f32 %v221, %v1448
  %1450 = vmatmul.bf16.gmra.mxu0 %v976
  %v1451 = vpop.f32.mrf.mxu0
  %v1452 = vadd.f32 %v221, %v1451
  %v1453 = vpop.f32.mrf.mxu0
  %v1454 = vadd.f32 %v221, %v1453
  %1455 = vmatmul.bf16.gmra.mxu0 %v979
  %v1456 = vpop.f32.mrf.mxu0
  %v1457 = vadd.f32 %v221, %v1456
  %v1458 = vpop.f32.mrf.mxu0
  %v1459 = vadd.f32 %v221, %v1458
  %1460 = vmatmul.bf16.gmra.mxu0 %v982
  %v1461 = vpop.f32.mrf.mxu0
  %v1462 = vadd.f32 %v221, %v1461
  %v1463 = vpop.f32.mrf.mxu0
  %v1464 = vadd.f32 %v221, %v1463
  %1465 = vmatmul.bf16.gmra.mxu0 %v985
  %v1466 = vpop.f32.mrf.mxu0
  %v1467 = vadd.f32 %v221, %v1466
  %v1468 = vpop.f32.mrf.mxu0
  %v1469 = vadd.f32 %v221, %v1468
  %1470 = vmatmul.bf16.gmra.mxu0 %v988
  %v1471 = vpop.f32.mrf.mxu0
  %v1472 = vadd.f32 %v221, %v1471
  %v1473 = vpop.f32.mrf.mxu0
  %v1474 = vadd.f32 %v221, %v1473
  %1475 = vmatmul.bf16.gmra.mxu0 %v991
  %v1476 = vpop.f32.mrf.mxu0
  %v1477 = vadd.f32 %v221, %v1476
  %v1478 = vpop.f32.mrf.mxu0
  %v1479 = vadd.f32 %v221, %v1478
  %1480 = vmatmul.bf16.gmra.mxu0 %v994
  %v1481 = vpop.f32.mrf.mxu0
  %v1482 = vadd.f32 %v221, %v1481
  %v1483 = vpop.f32.mrf.mxu0
  %v1484 = vadd.f32 %v221, %v1483
  %1485 = vmatmul.bf16.gmra.mxu0 %v997
  %v1486 = vpop.f32.mrf.mxu0
  %v1487 = vadd.f32 %v221, %v1486
  %v1488 = vpop.f32.mrf.mxu0
  %v1489 = vadd.f32 %v221, %v1488
  %1490 = vmatmul.bf16.gmra.mxu0 %v1000
  %v1491 = vpop.f32.mrf.mxu0
  %v1492 = vadd.f32 %v221, %v1491
  %v1493 = vpop.f32.mrf.mxu0
  %v1494 = vadd.f32 %v221, %v1493
  %1495 = vmatmul.bf16.gmra.mxu0 %v1003
  %v1496 = vpop.f32.mrf.mxu0
  %v1497 = vadd.f32 %v221, %v1496
  %v1498 = vpop.f32.mrf.mxu0
  %v1499 = vadd.f32 %v221, %v1498
  %1500 = vmatmul.bf16.gmra.mxu0 %v1006
  %v1501 = vpop.f32.mrf.mxu0
  %v1502 = vadd.f32 %v221, %v1501
  %v1503 = vpop.f32.mrf.mxu0
  %v1504 = vadd.f32 %v221, %v1503
  %1505 = vmatmul.bf16.gmra.mxu0 %v1009
  %v1506 = vpop.f32.mrf.mxu0
  %v1507 = vadd.f32 %v221, %v1506
  %v1508 = vpop.f32.mrf.mxu0
  %v1509 = vadd.f32 %v221, %v1508
  %1510 = vmatmul.bf16.gmra.mxu0 %v1012
  %v1511 = vpop.f32.mrf.mxu0
  %v1512 = vadd.f32 %v221, %v1511
  %v1513 = vpop.f32.mrf.mxu0
  %v1514 = vadd.f32 %v221, %v1513
  %1515 = vmatmul.bf16.gmra.mxu0 %v1015
  %v1516 = vpop.f32.mrf.mxu0
  %v1517 = vadd.f32 %v221, %v1516
  %v1518 = vpop.f32.mrf.mxu0
  %v1519 = vadd.f32 %v221, %v1518
  %1520 = vmatmul.bf16.gmra.mxu0 %v1018
  %v1521 = vpop.f32.mrf.mxu0
  %v1522 = vadd.f32 %v221, %v1521
  %v1523 = vpop.f32.mrf.mxu0
  %v1524 = vadd.f32 %v221, %v1523
  %1525 = vmatmul.bf16.gmra.mxu0 %v1021
  %v1526 = vpop.f32.mrf.mxu0
  %v1527 = vadd.f32 %v221, %v1526
  %v1528 = vpop.f32.mrf.mxu0
  %v1529 = vadd.f32 %v221, %v1528
  %1530 = vmatmul.bf16.gmra.mxu0 %v1024
  %v1531 = vpop.f32.mrf.mxu0
  %v1532 = vadd.f32 %v221, %v1531
  %v1533 = vpop.f32.mrf.mxu0
  %v1534 = vadd.f32 %v221, %v1533
  %1535 = vmatmul.bf16.gmra.mxu0 %v1027
  %v1536 = vpop.f32.mrf.mxu0
  %v1537 = vadd.f32 %v221, %v1536
  %v1538 = vpop.f32.mrf.mxu0
  %v1539 = vadd.f32 %v221, %v1538
  %1540 = vmatmul.bf16.gmra.mxu0 %v1030
  %v1541 = vpop.f32.mrf.mxu0
  %v1542 = vadd.f32 %v221, %v1541
  %v1543 = vpop.f32.mrf.mxu0
  %v1544 = vadd.f32 %v221, %v1543
  %1545 = vmatmul.bf16.gmra.mxu0 %v1033
  %v1546 = vpop.f32.mrf.mxu0
  %v1547 = vadd.f32 %v221, %v1546
  %v1548 = vpop.f32.mrf.mxu0
  %v1549 = vadd.f32 %v221, %v1548
  %1550 = vdwg.mxu0
  %v1551 = vtanh.pop %v1052
  %v1552 = vtanh.pop %v1054
  %v1553 = vtanh.pop %v1057
  %v1554 = vtanh.pop %v1059
  %v1555 = vtanh.pop %v1062
  %v1556 = vtanh.pop %v1064
  %v1557 = vtanh.pop %v1067
  %v1558 = vtanh.pop %v1069
  %v1559 = vtanh.pop %v1072
  %v1560 = vtanh.pop %v1074
  %v1561 = vtanh.pop %v1077
  %v1562 = vtanh.pop %v1079
  %v1563 = vtanh.pop %v1082
  %v1564 = vtanh.pop %v1084
  %v1565 = vtanh.pop %v1087
  %v1566 = vtanh.pop %v1089
  %v1567 = vtanh.pop %v1092
  %v1568 = vtanh.pop %v1094
  %v1569 = vtanh.pop %v1097
  %v1570 = vtanh.pop %v1099
  %v1571 = vtanh.pop %v1102
  %v1572 = vtanh.pop %v1104
  %v1573 = vtanh.pop %v1107
  %v1574 = vtanh.pop %v1109
  %v1575 = vtanh.pop %v1112
  %v1576 = vtanh.pop %v1114
  %v1577 = vtanh.pop %v1117
  %v1578 = vtanh.pop %v1119
  %v1579 = vtanh.pop %v1122
  %v1580 = vtanh.pop %v1124
  %v1581 = vtanh.pop %v1127
  %v1582 = vtanh.pop %v1129
  %v1583 = vtanh.pop %v1132
  %v1584 = vtanh.pop %v1134
  %v1585 = vtanh.pop %v1137
  %v1586 = vtanh.pop %v1139
  %v1587 = vtanh.pop %v1142
  %v1588 = vtanh.pop %v1144
  %v1589 = vtanh.pop %v1147
  %v1590 = vtanh.pop %v1149
  %v1591 = vtanh.pop %v1152
  %v1592 = vtanh.pop %v1154
  %v1593 = vtanh.pop %v1157
  %v1594 = vtanh.pop %v1159
  %v1595 = vtanh.pop %v1162
  %v1596 = vtanh.pop %v1164
  %v1597 = vtanh.pop %v1167
  %v1598 = vtanh.pop %v1169
  %v1599 = vtanh.pop %v1172
  %v1600 = vtanh.pop %v1174
  %v1601 = vtanh.pop %v1177
  %v1602 = vtanh.pop %v1179
  %v1603 = vtanh.pop %v1182
  %v1604 = vtanh.pop %v1184
  %v1605 = vtanh.pop %v1187
  %v1606 = vtanh.pop %v1189
  %v1607 = vtanh.pop %v1192
  %v1608 = vtanh.pop %v1194
  %v1609 = vtanh.pop %v1197
  %v1610 = vtanh.pop %v1199
  %v1611 = vtanh.pop %v1202
  %v1612 = vtanh.pop %v1204
  %v1613 = vtanh.pop %v1207
  %v1614 = vtanh.pop %v1209
  %v1615 = vtanh.pop %v1212
  %v1616 = vtanh.pop %v1214
  %v1617 = vtanh.pop %v1217
  %v1618 = vtanh.pop %v1219
  %v1619 = vtanh.pop %v1222
  %v1620 = vtanh.pop %v1224
  %v1621 = vtanh.pop %v1227
  %v1622 = vtanh.pop %v1229
  %v1623 = vtanh.pop %v1232
  %v1624 = vtanh.pop %v1234
  %v1625 = vtanh.pop %v1237
  %v1626 = vtanh.pop %v1239
  %v1627 = vtanh.pop %v1242
  %v1628 = vtanh.pop %v1244
  %v1629 = vtanh.pop %v1247
  %v1630 = vtanh.pop %v1249
  %v1631 = vtanh.pop %v1252
  %v1632 = vtanh.pop %v1254
  %v1633 = vtanh.pop %v1257
  %v1634 = vtanh.pop %v1259
  %v1635 = vtanh.pop %v1262
  %v1636 = vtanh.pop %v1264
  %v1637 = vtanh.pop %v1267
  %v1638 = vtanh.pop %v1269
  %v1639 = vtanh.pop %v1272
  %v1640 = vtanh.pop %v1274
  %v1641 = vtanh.pop %v1277
  %v1642 = vtanh.pop %v1279
  %v1643 = vtanh.pop %v1282
  %v1644 = vtanh.pop %v1284
  %v1645 = vtanh.pop %v1287
  %v1646 = vtanh.pop %v1289
  %v1647 = vtanh.pop %v1292
  %v1648 = vtanh.pop %v1294
  %v1649 = vtanh.pop %v1297
  %v1650 = vtanh.pop %v1299
  %v1651 = vtanh.pop %v1302
  %v1652 = vtanh.pop %v1304
  %v1653 = vtanh.pop %v1307
  %v1654 = vtanh.pop %v1309
  %v1655 = vtanh.pop %v1312
  %v1656 = vtanh.pop %v1314
  %v1657 = vtanh.pop %v1317
  %v1658 = vtanh.pop %v1319
  %v1659 = vtanh.pop %v1322
  %v1660 = vtanh.pop %v1324
  %v1661 = vtanh.pop %v1327
  %v1662 = vtanh.pop %v1329
  %v1663 = vtanh.pop %v1332
  %v1664 = vtanh.pop %v1334
  %v1665 = vtanh.pop %v1337
  %v1666 = vtanh.pop %v1339
  %v1667 = vtanh.pop %v1342
  %v1668 = vtanh.pop %v1344
  %v1669 = vtanh.pop %v1347
  %v1670 = vtanh.pop %v1349
  %v1671 = vtanh.pop %v1352
  %v1672 = vtanh.pop %v1354
  %v1673 = vtanh.pop %v1357
  %v1674 = vtanh.pop %v1359
  %v1675 = vtanh.pop %v1362
  %v1676 = vtanh.pop %v1364
  %v1677 = vtanh.pop %v1367
  %v1678 = vtanh.pop %v1369
  %v1679 = vtanh.pop %v1372
  %v1680 = vtanh.pop %v1374
  %v1681 = vtanh.pop %v1377
  %v1682 = vtanh.pop %v1379
  %v1683 = vtanh.pop %v1382
  %v1684 = vtanh.pop %v1384
  %v1685 = vtanh.pop %v1387
  %v1686 = vtanh.pop %v1389
  %v1687 = vtanh.pop %v1392
  %v1688 = vtanh.pop %v1394
  %v1689 = vtanh.pop %v1397
  %v1690 = vtanh.pop %v1399
  %v1691 = vtanh.pop %v1402
  %v1692 = vtanh.pop %v1404
  %v1693 = vtanh.pop %v1407
  %v1694 = vtanh.pop %v1409
  %v1695 = vtanh.pop %v1412
  %v1696 = vtanh.pop %v1414
  %v1697 = vtanh.pop %v1417
  %v1698 = vtanh.pop %v1419
  %v1699 = vtanh.pop %v1422
  %v1700 = vtanh.pop %v1424
  %v1701 = vtanh.pop %v1427
  %v1702 = vtanh.pop %v1429
  %v1703 = vtanh.pop %v1432
  %v1704 = vtanh.pop %v1434
  %v1705 = vtanh.pop %v1437
  %v1706 = vtanh.pop %v1439
  %v1707 = vtanh.pop %v1442
  %v1708 = vtanh.pop %v1444
  %v1709 = vtanh.pop %v1447
  %v1710 = vtanh.pop %v1449
  %v1711 = vtanh.pop %v1452
  %v1712 = vtanh.pop %v1454
  %v1713 = vtanh.pop %v1457
  %v1714 = vtanh.pop %v1459
  %v1715 = vtanh.pop %v1462
  %v1716 = vtanh.pop %v1464
  %v1717 = vtanh.pop %v1467
  %v1718 = vtanh.pop %v1469
  %v1719 = vtanh.pop %v1472
  %v1720 = vtanh.pop %v1474
  %v1721 = vtanh.pop %v1477
  %v1722 = vtanh.pop %v1479
  %v1723 = vtanh.pop %v1482
  %v1724 = vtanh.pop %v1484
  %v1725 = vtanh.pop %v1487
  %v1726 = vtanh.pop %v1489
  %v1727 = vtanh.pop %v1492
  %v1728 = vtanh.pop %v1494
  %v1729 = vtanh.pop %v1497
  %v1730 = vtanh.pop %v1499
  %v1731 = vtanh.pop %v1502
  %v1732 = vtanh.pop %v1504
  %v1733 = vtanh.pop %v1507
  %v1734 = vtanh.pop %v1509
  %v1735 = vtanh.pop %v1512
  %v1736 = vtanh.pop %v1514
  %v1737 = vtanh.pop %v1517
  %v1738 = vtanh.pop %v1519
  %v1739 = vtanh.pop %v1522
  %v1740 = vtanh.pop %v1524
  %v1741 = vtanh.pop %v1527
  %v1742 = vtanh.pop %v1529
  %v1743 = vtanh.pop %v1532
  %v1744 = vtanh.pop %v1534
  %v1745 = vtanh.pop %v1537
  %v1746 = vtanh.pop %v1539
  %v1747 = vtanh.pop %v1542
  %v1748 = vtanh.pop %v1544
  %v1749 = vtanh.pop %v1547
  %v1750 = vtanh.pop %v1549
  %v1751 = vadd.f32 %v1551, %v1601
  %v1752 = vadd.f32 %v1552, %v1602
  %v1753 = vadd.f32 %v1553, %v1603
  %v1754 = vadd.f32 %v1554, %v1604
  %v1755 = vadd.f32 %v1555, %v1605
  %v1756 = vadd.f32 %v1556, %v1606
  %v1757 = vadd.f32 %v1557, %v1607
  %v1758 = vadd.f32 %v1558, %v1608
  %v1759 = vadd.f32 %v1559, %v1609
  %v1760 = vadd.f32 %v1560, %v1610
  %v1761 = vadd.f32 %v1561, %v1611
  %v1762 = vadd.f32 %v1562, %v1612
  %v1763 = vadd.f32 %v1563, %v1613
  %v1764 = vadd.f32 %v1564, %v1614
  %v1765 = vadd.f32 %v1565, %v1615
  %v1766 = vadd.f32 %v1566, %v1616
  %v1767 = vadd.f32 %v1567, %v1617
  %v1768 = vadd.f32 %v1568, %v1618
  %v1769 = vadd.f32 %v1569, %v1619
  %v1770 = vadd.f32 %v1570, %v1620
  %v1771 = vadd.f32 %v1571, %v1621
  %v1772 = vadd.f32 %v1572, %v1622
  %v1773 = vadd.f32 %v1573, %v1623
  %v1774 = vadd.f32 %v1574, %v1624
  %v1775 = vadd.f32 %v1575, %v1625
  %v1776 = vadd.f32 %v1576, %v1626
  %v1777 = vadd.f32 %v1577, %v1627
  %v1778 = vadd.f32 %v1578, %v1628
  %v1779 = vadd.f32 %v1579, %v1629
  %v1780 = vadd.f32 %v1580, %v1630
  %v1781 = vadd.f32 %v1581, %v1631
  %v1782 = vadd.f32 %v1582, %v1632
  %v1783 = vadd.f32 %v1583, %v1633
  %v1784 = vadd.f32 %v1584, %v1634
  %v1785 = vadd.f32 %v1585, %v1635
  %v1786 = vadd.f32 %v1586, %v1636
  %v1787 = vadd.f32 %v1587, %v1637
  %v1788 = vadd.f32 %v1588, %v1638
  %v1789 = vadd.f32 %v1589, %v1639
  %v1790 = vadd.f32 %v1590, %v1640
  %v1791 = vadd.f32 %v1591, %v1641
  %v1792 = vadd.f32 %v1592, %v1642
  %v1793 = vadd.f32 %v1593, %v1643
  %v1794 = vadd.f32 %v1594, %v1644
  %v1795 = vadd.f32 %v1595, %v1645
  %v1796 = vadd.f32 %v1596, %v1646
  %v1797 = vadd.f32 %v1597, %v1647
  %v1798 = vadd.f32 %v1598, %v1648
  %v1799 = vadd.f32 %v1599, %v1649
  %v1800 = vadd.f32 %v1600, %v1650
  %v1801 = vadd.f32 %v1751, %v1651
  %v1802 = vadd.f32 %v1752, %v1652
  %v1803 = vadd.f32 %v1753, %v1653
  %v1804 = vadd.f32 %v1754, %v1654
  %v1805 = vadd.f32 %v1755, %v1655
  %v1806 = vadd.f32 %v1756, %v1656
  %v1807 = vadd.f32 %v1757, %v1657
  %v1808 = vadd.f32 %v1758, %v1658
  %v1809 = vadd.f32 %v1759, %v1659
  %v1810 = vadd.f32 %v1760, %v1660
  %v1811 = vadd.f32 %v1761, %v1661
  %v1812 = vadd.f32 %v1762, %v1662
  %v1813 = vadd.f32 %v1763, %v1663
  %v1814 = vadd.f32 %v1764, %v1664
  %v1815 = vadd.f32 %v1765, %v1665
  %v1816 = vadd.f32 %v1766, %v1666
  %v1817 = vadd.f32 %v1767, %v1667
  %v1818 = vadd.f32 %v1768, %v1668
  %v1819 = vadd.f32 %v1769, %v1669
  %v1820 = vadd.f32 %v1770, %v1670
  %v1821 = vadd.f32 %v1771, %v1671
  %v1822 = vadd.f32 %v1772, %v1672
  %v1823 = vadd.f32 %v1773, %v1673
  %v1824 = vadd.f32 %v1774, %v1674
  %v1825 = vadd.f32 %v1775, %v1675
  %v1826 = vadd.f32 %v1776, %v1676
  %v1827 = vadd.f32 %v1777, %v1677
  %v1828 = vadd.f32 %v1778, %v1678
  %v1829 = vadd.f32 %v1779, %v1679
  %v1830 = vadd.f32 %v1780, %v1680
  %v1831 = vadd.f32 %v1781, %v1681
  %v1832 = vadd.f32 %v1782, %v1682
  %v1833 = vadd.f32 %v1783, %v1683
  %v1834 = vadd.f32 %v1784, %v1684
  %v1835 = vadd.f32 %v1785, %v1685
  %v1836 = vadd.f32 %v1786, %v1686
  %v1837 = vadd.f32 %v1787, %v1687
  %v1838 = vadd.f32 %v1788, %v1688
  %v1839 = vadd.f32 %v1789, %v1689
  %v1840 = vadd.f32 %v1790, %v1690
  %v1841 = vadd.f32 %v1791, %v1691
  %v1842 = vadd.f32 %v1792, %v1692
  %v1843 = vadd.f32 %v1793, %v1693
  %v1844 = vadd.f32 %v1794, %v1694
  %v1845 = vadd.f32 %v1795, %v1695
  %v1846 = vadd.f32 %v1796, %v1696
  %v1847 = vadd.f32 %v1797, %v1697
  %v1848 = vadd.f32 %v1798, %v1698
  %v1849 = vadd.f32 %v1799, %v1699
  %v1850 = vadd.f32 %v1800, %v1700
  %v1851 = vadd.f32 %v1801, %v1701
  %v1852 = vadd.f32 %v1802, %v1702
  %v1853 = vadd.f32 %v1803, %v1703
  %v1854 = vadd.f32 %v1804, %v1704
  %v1855 = vadd.f32 %v1805, %v1705
  %v1856 = vadd.f32 %v1806, %v1706
  %v1857 = vadd.f32 %v1807, %v1707
  %v1858 = vadd.f32 %v1808, %v1708
  %v1859 = vadd.f32 %v1809, %v1709
  %v1860 = vadd.f32 %v1810, %v1710
  %v1861 = vadd.f32 %v1811, %v1711
  %v1862 = vadd.f32 %v1812, %v1712
  %v1863 = vadd.f32 %v1813, %v1713
  %v1864 = vadd.f32 %v1814, %v1714
  %v1865 = vadd.f32 %v1815, %v1715
  %v1866 = vadd.f32 %v1816, %v1716
  %v1867 = vadd.f32 %v1817, %v1717
  %v1868 = vadd.f32 %v1818, %v1718
  %v1869 = vadd.f32 %v1819, %v1719
  %v1870 = vadd.f32 %v1820, %v1720
  %v1871 = vadd.f32 %v1821, %v1721
  %v1872 = vadd.f32 %v1822, %v1722
  %v1873 = vadd.f32 %v1823, %v1723
  %v1874 = vadd.f32 %v1824, %v1724
  %v1875 = vadd.f32 %v1825, %v1725
  %v1876 = vadd.f32 %v1826, %v1726
  %v1877 = vadd.f32 %v1827, %v1727
  %v1878 = vadd.f32 %v1828, %v1728
  %v1879 = vadd.f32 %v1829, %v1729
  %v1880 = vadd.f32 %v1830, %v1730
  %v1881 = vadd.f32 %v1831, %v1731
  %v1882 = vadd.f32 %v1832, %v1732
  %v1883 = vadd.f32 %v1833, %v1733
  %v1884 = vadd.f32 %v1834, %v1734
  %v1885 = vadd.f32 %v1835, %v1735
  %v1886 = vadd.f32 %v1836, %v1736
  %v1887 = vadd.f32 %v1837, %v1737
  %v1888 = vadd.f32 %v1838, %v1738
  %v1889 = vadd.f32 %v1839, %v1739
  %v1890 = vadd.f32 %v1840, %v1740
  %v1891 = vadd.f32 %v1841, %v1741
  %v1892 = vadd.f32 %v1842, %v1742
  %v1893 = vadd.f32 %v1843, %v1743
  %v1894 = vadd.f32 %v1844, %v1744
  %v1895 = vadd.f32 %v1845, %v1745
  %v1896 = vadd.f32 %v1846, %v1746
  %v1897 = vadd.f32 %v1847, %v1747
  %v1898 = vadd.f32 %v1848, %v1748
  %v1899 = vadd.f32 %v1849, %v1749
  %v1900 = vadd.f32 %v1850, %v1750
  %v1901 = vmul.f32 %v1851, 0.25
  %v1902 = vmul.f32 %v1852, 0.25
  %v1903 = vmul.f32 %v1853, 0.25
  %v1904 = vmul.f32 %v1854, 0.25
  %v1905 = vmul.f32 %v1855, 0.25
  %v1906 = vmul.f32 %v1856, 0.25
  %v1907 = vmul.f32 %v1857, 0.25
  %v1908 = vmul.f32 %v1858, 0.25
  %v1909 = vmul.f32 %v1859, 0.25
  %v1910 = vmul.f32 %v1860, 0.25
  %v1911 = vmul.f32 %v1861, 0.25
  %v1912 = vmul.f32 %v1862, 0.25
  %v1913 = vmul.f32 %v1863, 0.25
  %v1914 = vmul.f32 %v1864, 0.25
  %v1915 = vmul.f32 %v1865, 0.25
  %v1916 = vmul.f32 %v1866, 0.25
  %v1917 = vmul.f32 %v1867, 0.25
  %v1918 = vmul.f32 %v1868, 0.25
  %v1919 = vmul.f32 %v1869, 0.25
  %v1920 = vmul.f32 %v1870, 0.25
  %v1921 = vmul.f32 %v1871, 0.25
  %v1922 = vmul.f32 %v1872, 0.25
  %v1923 = vmul.f32 %v1873, 0.25
  %v1924 = vmul.f32 %v1874, 0.25
  %v1925 = vmul.f32 %v1875, 0.25
  %v1926 = vmul.f32 %v1876, 0.25
  %v1927 = vmul.f32 %v1877, 0.25
  %v1928 = vmul.f32 %v1878, 0.25
  %v1929 = vmul.f32 %v1879, 0.25
  %v1930 = vmul.f32 %v1880, 0.25
  %v1931 = vmul.f32 %v1881, 0.25
  %v1932 = vmul.f32 %v1882, 0.25
  %v1933 = vmul.f32 %v1883, 0.25
  %v1934 = vmul.f32 %v1884, 0.25
  %v1935 = vmul.f32 %v1885, 0.25
  %v1936 = vmul.f32 %v1886, 0.25
  %v1937 = vmul.f32 %v1887, 0.25
  %v1938 = vmul.f32 %v1888, 0.25
  %v1939 = vmul.f32 %v1889, 0.25
  %v1940 = vmul.f32 %v1890, 0.25
  %v1941 = vmul.f32 %v1891, 0.25
  %v1942 = vmul.f32 %v1892, 0.25
  %v1943 = vmul.f32 %v1893, 0.25
  %v1944 = vmul.f32 %v1894, 0.25
  %v1945 = vmul.f32 %v1895, 0.25
  %v1946 = vmul.f32 %v1896, 0.25
  %v1947 = vmul.f32 %v1897, 0.25
  %v1948 = vmul.f32 %v1898, 0.25
  %v1949 = vmul.f32 %v1899, 0.25
  %v1950 = vmul.f32 %v1900, 0.25
  %v1951 = vpack.c.bf16 %v1901, %v1901
  %v1952 = vpack.c.bf16 %v1902, %v1902
  %v1953 = vpack.c.bf16 %v1903, %v1903
  %v1954 = vpack.c.bf16 %v1904, %v1904
  %v1955 = vpack.c.bf16 %v1905, %v1905
  %v1956 = vpack.c.bf16 %v1906, %v1906
  %v1957 = vpack.c.bf16 %v1907, %v1907
  %v1958 = vpack.c.bf16 %v1908, %v1908
  %v1959 = vpack.c.bf16 %v1909, %v1909
  %v1960 = vpack.c.bf16 %v1910, %v1910
  %v1961 = vpack.c.bf16 %v1911, %v1911
  %v1962 = vpack.c.bf16 %v1912, %v1912
  %v1963 = vpack.c.bf16 %v1913, %v1913
  %v1964 = vpack.c.bf16 %v1914, %v1914
  %v1965 = vpack.c.bf16 %v1915, %v1915
  %v1966 = vpack.c.bf16 %v1916, %v1916
  %v1967 = vpack.c.bf16 %v1917, %v1917
  %v1968 = vpack.c.bf16 %v1918, %v1918
  %v1969 = vpack.c.bf16 %v1919, %v1919
  %v1970 = vpack.c.bf16 %v1920, %v1920
  %v1971 = vpack.c.bf16 %v1921, %v1921
  %v1972 = vpack.c.bf16 %v1922, %v1922
  %v1973 = vpack.c.bf16 %v1923, %v1923
  %v1974 = vpack.c.bf16 %v1924, %v1924
  %v1975 = vpack.c.bf16 %v1925, %v1925
  %v1976 = vpack.c.bf16 %v1926, %v1926
  %v1977 = vpack.c.bf16 %v1927, %v1927
  %v1978 = vpack.c.bf16 %v1928, %v1928
  %v1979 = vpack.c.bf16 %v1929, %v1929
  %v1980 = vpack.c.bf16 %v1930, %v1930
  %v1981 = vpack.c.bf16 %v1931, %v1931
  %v1982 = vpack.c.bf16 %v1932, %v1932
  %v1983 = vpack.c.bf16 %v1933, %v1933
  %v1984 = vpack.c.bf16 %v1934, %v1934
  %v1985 = vpack.c.bf16 %v1935, %v1935
  %v1986 = vpack.c.bf16 %v1936, %v1936
  %v1987 = vpack.c.bf16 %v1937, %v1937
  %v1988 = vpack.c.bf16 %v1938, %v1938
  %v1989 = vpack.c.bf16 %v1939, %v1939
  %v1990 = vpack.c.bf16 %v1940, %v1940
  %v1991 = vpack.c.bf16 %v1941, %v1941
  %v1992 = vpack.c.bf16 %v1942, %v1942
  %v1993 = vpack.c.bf16 %v1943, %v1943
  %v1994 = vpack.c.bf16 %v1944, %v1944
  %v1995 = vpack.c.bf16 %v1945, %v1945
  %v1996 = vpack.c.bf16 %v1946, %v1946
  %v1997 = vpack.c.bf16 %v1947, %v1947
  %v1998 = vpack.c.bf16 %v1948, %v1948
  %v1999 = vpack.c.bf16 %v1949, %v1949
  %v2000 = vpack.c.bf16 %v1950, %v1950
  %2001 = vst [vmem:[%s3] sm:$0xf] %v1951
  %2002 = vst [vmem:[%s3 + $0x4] sm:$0xf] %v1952
  %2003 = vst [vmem:[%s3 + $0x8] sm:$0xf] %v1953
  %2004 = vst [vmem:[%s3 + $0xc] sm:$0xf] %v1954
  %2005 = vst [vmem:[%s3 + $0x10] sm:$0xf] %v1955
  %2006 = vst [vmem:[%s3 + $0x14] sm:$0xf] %v1956
  %2007 = vst [vmem:[%s3 + $0x18] sm:$0xf] %v1957
  %2008 = vst [vmem:[%s3 + $0x1c] sm:$0xf] %v1958
  %2009 = vst [vmem:[%s3 + $0x20] sm:$0xf] %v1959
  %2010 = vst [vmem:[%s3 + $0x24] sm:$0xf] %v1960
  %2011 = vst [vmem:[%s3 + $0x28] sm:$0xf] %v1961
  %2012 = vst [vmem:[%s3 + $0x2c] sm:$0xf] %v1962
  %2013 = vst [vmem:[%s3 + $0x30] sm:$0xf] %v1963
  %2014 = vst [vmem:[%s3 + $0x34] sm:$0xf] %v1964
  %2015 = vst [vmem:[%s3 + $0x38] sm:$0xf] %v1965
  %2016 = vst [vmem:[%s3 + $0x3c] sm:$0xf] %v1966
  %2017 = vst [vmem:[%s3 + $0x40] sm:$0xf] %v1967
  %2018 = vst [vmem:[%s3 + $0x44] sm:$0xf] %v1968
  %2019 = vst [vmem:[%s3 + $0x48] sm:$0xf] %v1969
  %2020 = vst [vmem:[%s3 + $0x4c] sm:$0xf] %v1970
  %2021 = vst [vmem:[%s3 + $0x50] sm:$0xf] %v1971
  %2022 = vst [vmem:[%s3 + $0x54] sm:$0xf] %v1972
  %2023 = vst [vmem:[%s3 + $0x58] sm:$0xf] %v1973
  %2024 = vst [vmem:[%s3 + $0x5c] sm:$0xf] %v1974
  %2025 = vst [vmem:[%s3 + $0x60] sm:$0xf] %v1975
  %2026 = vst [vmem:[%s3 + $0x64] sm:$0xf] %v1976
  %2027 = vst [vmem:[%s3 + $0x68] sm:$0xf] %v1977
  %2028 = vst [vmem:[%s3 + $0x6c] sm:$0xf] %v1978
  %2029 = vst [vmem:[%s3 + $0x70] sm:$0xf] %v1979
  %2030 = vst [vmem:[%s3 + $0x74] sm:$0xf] %v1980
  %2031 = vst [vmem:[%s3 + $0x78] sm:$0xf] %v1981
  %2032 = vst [vmem:[%s3 + $0x7c] sm:$0xf] %v1982
  %2033 = vst [vmem:[%s3 + $0x80] sm:$0xf] %v1983
  %2034 = vst [vmem:[%s3 + $0x84] sm:$0xf] %v1984
  %2035 = vst [vmem:[%s3 + $0x88] sm:$0xf] %v1985
  %2036 = vst [vmem:[%s3 + $0x8c] sm:$0xf] %v1986
  %2037 = vst [vmem:[%s3 + $0x90] sm:$0xf] %v1987
  %2038 = vst [vmem:[%s3 + $0x94] sm:$0xf] %v1988
  %2039 = vst [vmem:[%s3 + $0x98] sm:$0xf] %v1989
  %2040 = vst [vmem:[%s3 + $0x9c] sm:$0xf] %v1990
  %2041 = vst [vmem:[%s3 + $0xa0] sm:$0xf] %v1991
  %2042 = vst [vmem:[%s3 + $0xa4] sm:$0xf] %v1992
  %2043 = vst [vmem:[%s3 + $0xa8] sm:$0xf] %v1993
  %2044 = vst [vmem:[%s3 + $0xac] sm:$0xf] %v1994
  %2045 = vst [vmem:[%s3 + $0xb0] sm:$0xf] %v1995
  %2046 = vst [vmem:[%s3 + $0xb4] sm:$0xf] %v1996
  %2047 = vst [vmem:[%s3 + $0xb8] sm:$0xf] %v1997
  %2048 = vst [vmem:[%s3 + $0xbc] sm:$0xf] %v1998
  %2049 = vst [vmem:[%s3 + $0xc0] sm:$0xf] %v1999
  %2050 = vst [vmem:[%s3 + $0xc4] sm:$0xf] %v2000
  // Predicated region
  $region14: #{lenet_forward.3} parent=0 // pred_check
    _
  $region15: #{lenet_forward.3} parent=0 // pred_check_branch
    %2052 = sbr.rel (0) target = $region17
  $region16: #{lenet_forward.3} parent=0 // pred_region
    _
  $region17: #{lenet_forward.3} parent=0 // pred_fallthru
    _
  // Predicated region
  $region18: #{lenet_forward.3} parent=0 // pred_check
    _
  $region19: #{lenet_forward.3} parent=0 // pred_check_branch
    %2054 = sbr.rel (0) target = $region21
  $region20: #{lenet_forward.3} parent=0 // pred_region
    _
  $region21: #{lenet_forward.3} parent=0 // pred_fallthru
    _

// kernel: lenet_forward.4
$region0: #{lenet_forward.4}
  #allocation0 [shape = 'u32[]', space=smem, size = 0x4, offset = 0x4, fixed_abs, tag = 'smem constant byte address 0x4 - core index']
  #allocation1 [shape = 'u32[72,128]{1,0:T(1,128)}', space=vmem, size = 0x9000, scoped, tag = 'internal scratch']
  %s0 = inlined_call_operand.vmem [shape: bf16[4,64,150], index: 0, kind: input, shape index: {}]
  %s1 = inlined_call_operand.vmem [shape: bf16[150,128], index: 1, kind: input, shape index: {}]
  %s2 = inlined_call_operand.vmem [shape: f32[1,128], index: 2, kind: input, shape index: {}]
  %s3 = inlined_call_operand.vmem [shape: bf16[64,128], index: 3, kind: output, shape index: {}]
  %s4 = sld [smem:[#allocation0]]
  $region22: #{lenet_forward.4} parent=0
    _
  %s6 = ssub.s32 1, %s4
  %s7 = scalar_select 0, %s6, %s4
  // Predicated region
  $region2: #{lenet_forward.4} parent=0 // pred_check
    _
  $region3: #{lenet_forward.4} parent=0 // pred_check_branch
    %9 = sbr.rel (0) target = $region5
  $region4: #{lenet_forward.4} parent=0 // pred_region
    _
  $region5: #{lenet_forward.4} parent=0 // pred_fallthru
    _
  // Predicated region
  $region6: #{lenet_forward.4} parent=0 // pred_check
    _
  $region7: #{lenet_forward.4} parent=0 // pred_check_branch
    %11 = sbr.rel (0) target = $region9
  $region8: #{lenet_forward.4} parent=0 // pred_region
    _
  $region9: #{lenet_forward.4} parent=0 // pred_fallthru
    _
  // Predicated region
  $region10: #{lenet_forward.4} parent=0 // pred_check
    _
  $region11: #{lenet_forward.4} parent=0 // pred_check_branch
    %13 = sbr.rel (0) target = $region13
  $region12: #{lenet_forward.4} parent=0 // pred_region
    _
  $region13: #{lenet_forward.4} parent=0 // pred_fallthru
    _
  %v15 = vld [vmem:[%s0] sm:$0xff]
  %v16 = vld [vmem:[%s0 + $0x8] sm:$0xff]
  %v17 = vld [vmem:[%s0 + $0x10] sm:$0xff]
  %v18 = vld [vmem:[%s0 + $0x18] sm:$0xff]
  %v19 = vld [vmem:[%s0 + $0x20] sm:$0xff]
  %v20 = vld [vmem:[%s0 + $0x28] sm:$0xff]
  %v21 = vld [vmem:[%s0 + $0x30] sm:$0xff]
  %v22 = vld [vmem:[%s0 + $0x38] sm:$0xff]
  %v23 = vld [vmem:[%s0 + $0x40] sm:$0xff]
  %v24 = vld [vmem:[%s0 + $0x48] sm:$0xff]
  %v25 = vld [vmem:[%s0 + $0x50] sm:$0xff]
  %v26 = vld [vmem:[%s0 + $0x58] sm:$0xff]
  %v27 = vld [vmem:[%s0 + $0x60] sm:$0xff]
  %v28 = vld [vmem:[%s0 + $0x68] sm:$0xff]
  %v29 = vld [vmem:[%s0 + $0x70] sm:$0xff]
  %v30 = vld [vmem:[%s0 + $0x78] sm:$0xff]
  %v31 = vld [vmem:[%s0 + $0x80] sm:$0xff]
  %v32 = vld [vmem:[%s0 + $0x88] sm:$0xff]
  %v33 = vld [vmem:[%s0 + $0x90] sm:$0xff]
  %v34 = vld [vmem:[%s0 + $0x98] sm:$0xff]
  %v35 = vld [vmem:[%s0 + $0xa0] sm:$0xff]
  %v36 = vld [vmem:[%s0 + $0xa8] sm:$0xff]
  %v37 = vld [vmem:[%s0 + $0xb0] sm:$0xff]
  %v38 = vld [vmem:[%s0 + $0xb8] sm:$0xff]
  %v39 = vld [vmem:[%s0 + $0xc0] sm:$0xff]
  %v40 = vld [vmem:[%s0 + $0xc8] sm:$0xff]
  %v41 = vld [vmem:[%s0 + $0xd0] sm:$0xff]
  %v42 = vld [vmem:[%s0 + $0xd8] sm:$0xff]
  %v43 = vld [vmem:[%s0 + $0xe0] sm:$0xff]
  %v44 = vld [vmem:[%s0 + $0xe8] sm:$0xff]
  %v45 = vld [vmem:[%s0 + $0xf0] sm:$0xff]
  %v46 = vld [vmem:[%s0 + $0xf8] sm:$0xff]
  %v47 = vld [vmem:[%s1] sm:$0xf]
  %v48 = vld [vmem:[%s1 + $0x4] sm:$0xf]
  %v49 = vld [vmem:[%s1 + $0x8] sm:$0xf]
  %v50 = vld [vmem:[%s1 + $0xc] sm:$0xf]
  %v51 = vld [vmem:[%s1 + $0x10] sm:$0xf]
  %v52 = vld [vmem:[%s1 + $0x14] sm:$0xf]
  %v53 = vld [vmem:[%s1 + $0x18] sm:$0xf]
  %v54 = vld [vmem:[%s1 + $0x1c] sm:$0xf]
  %v55 = vld [vmem:[%s1 + $0x20] sm:$0xf]
  %v56 = vld [vmem:[%s1 + $0x24] sm:$0xf]
  %v57 = vld [vmem:[%s1 + $0x28] sm:$0xf]
  %v58 = vld [vmem:[%s1 + $0x2c] sm:$0xf]
  %v59 = vld [vmem:[%s1 + $0x30] sm:$0xf]
  %v60 = vld [vmem:[%s1 + $0x34] sm:$0xf]
  %v61 = vld [vmem:[%s1 + $0x38] sm:$0xf]
  %v62 = vld [vmem:[%s1 + $0x3c] sm:$0xf]
  %v63 = vld [vmem:[%s1 + $0x40] sm:$0xf]
  %v64 = vld [vmem:[%s1 + $0x44] sm:$0xf]
  %v65 = vld [vmem:[%s1 + $0x48] sm:$0x7]
  %v66 = vld [vmem:[%s2] sm:$0x1]
  %v68 = vperm.slane %v66, 0
  %v102 = vunpack.c.l.b16 %v15
  %v103 = vunpack.c.h.b16 %v15
  %v104 = vunpack.c.l.b16 %v16
  %v105 = vunpack.c.h.b16 %v16
  %v106 = vunpack.c.l.b16 %v17
  %v107 = vunpack.c.h.b16 %v17
  %v108 = vunpack.c.l.b16 %v18
  %v109 = vunpack.c.h.b16 %v18
  %v110 = vunpack.c.l.b16 %v19
  %v111 = vunpack.c.h.b16 %v19
  %v112 = vunpack.c.l.b16 %v20
  %v113 = vunpack.c.h.b16 %v20
  %v114 = vunpack.c.l.b16 %v21
  %v115 = vunpack.c.h.b16 %v21
  %v116 = vunpack.c.l.b16 %v22
  %v117 = vunpack.c.h.b16 %v22
  %v118 = vunpack.c.l.b16 %v23
  %v119 = vunpack.c.h.b16 %v23
  %v120 = vunpack.c.l.b16 %v24
  %v121 = vunpack.c.h.b16 %v24
  %v122 = vunpack.c.l.b16 %v25
  %v123 = vunpack.c.h.b16 %v25
  %v124 = vunpack.c.l.b16 %v26
  %v125 = vunpack.c.h.b16 %v26
  %v126 = vunpack.c.l.b16 %v27
  %v127 = vunpack.c.h.b16 %v27
  %v128 = vunpack.c.l.b16 %v28
  %v129 = vunpack.c.h.b16 %v28
  %v130 = vunpack.c.l.b16 %v29
  %v131 = vunpack.c.h.b16 %v29
  %v132 = vunpack.c.l.b16 %v30
  %v133 = vunpack.c.h.b16 %v30
  %v134 = vunpack.c.l.b16 %v31
  %v135 = vunpack.c.h.b16 %v31
  %v136 = vunpack.c.l.b16 %v32
  %v137 = vunpack.c.h.b16 %v32
  %v138 = vunpack.c.l.b16 %v33
  %v139 = vunpack.c.h.b16 %v33
  %v140 = vunpack.c.l.b16 %v34
  %v141 = vunpack.c.h.b16 %v34
  %v142 = vunpack.c.l.b16 %v35
  %v143 = vunpack.c.h.b16 %v35
  %v144 = vunpack.c.l.b16 %v36
  %v145 = vunpack.c.h.b16 %v36
  %v146 = vunpack.c.l.b16 %v37
  %v147 = vunpack.c.h.b16 %v37
  %v148 = vunpack.c.l.b16 %v38
  %v149 = vunpack.c.h.b16 %v38
  %v150 = vunpack.c.l.b16 %v39
  %v151 = vunpack.c.h.b16 %v39
  %v152 = vunpack.c.l.b16 %v40
  %v153 = vunpack.c.h.b16 %v40
  %v154 = vunpack.c.l.b16 %v41
  %v155 = vunpack.c.h.b16 %v41
  %v156 = vunpack.c.l.b16 %v42
  %v157 = vunpack.c.h.b16 %v42
  %v158 = vunpack.c.l.b16 %v43
  %v159 = vunpack.c.h.b16 %v43
  %v160 = vunpack.c.l.b16 %v44
  %v161 = vunpack.c.h.b16 %v44
  %v162 = vunpack.c.l.b16 %v45
  %v163 = vunpack.c.h.b16 %v45
  %v164 = vunpack.c.l.b16 %v46
  %v165 = vunpack.c.h.b16 %v46
  %v166 = vpack.c.b16 %v104, %v102
  %v167 = vpack.c.b16 %v105, %v103
  %v168 = vpack.c.b16 %v108, %v106
  %v169 = vpack.c.b16 %v109, %v107
  %v170 = vpack.c.b16 %v112, %v110
  %v171 = vpack.c.b16 %v113, %v111
  %v172 = vpack.c.b16 %v116, %v114
  %v173 = vpack.c.b16 %v117, %v115
  %v174 = vpack.c.b16 %v120, %v118
  %v175 = vpack.c.b16 %v121, %v119
  %v176 = vpack.c.b16 %v124, %v122
  %v177 = vpack.c.b16 %v125, %v123
  %v178 = vpack.c.b16 %v128, %v126
  %v179 = vpack.c.b16 %v129, %v127
  %v180 = vpack.c.b16 %v132, %v130
  %v181 = vpack.c.b16 %v133, %v131
  %v182 = vpack.c.b16 %v136, %v134
  %v183 = vpack.c.b16 %v137, %v135
  %v184 = vpack.c.b16 %v140, %v138
  %v185 = vpack.c.b16 %v141, %v139
  %v186 = vpack.c.b16 %v144, %v142
  %v187 = vpack.c.b16 %v145, %v143
  %v188 = vpack.c.b16 %v148, %v146
  %v189 = vpack.c.b16 %v149, %v147
  %v190 = vpack.c.b16 %v152, %v150
  %v191 = vpack.c.b16 %v153, %v151
  %v192 = vpack.c.b16 %v156, %v154
  %v193 = vpack.c.b16 %v157, %v155
  %v194 = vpack.c.b16 %v160, %v158
  %v195 = vpack.c.b16 %v161, %v159
  %v196 = vpack.c.b16 %v164, %v162
  %v197 = vpack.c.b16 %v165, %v163
  %v233 = vunpack.c.l.b16 %v47
  %v234 = vunpack.c.l.b16 %v48
  %v235 = vunpack.c.l.b16 %v49
  %v236 = vunpack.c.l.b16 %v50
  %v237 = vunpack.c.l.b16 %v51
  %v238 = vunpack.c.l.b16 %v52
  %v239 = vunpack.c.l.b16 %v53
  %v240 = vunpack.c.l.b16 %v54
  %v241 = vunpack.c.l.b16 %v55
  %v242 = vunpack.c.l.b16 %v56
  %v243 = vunpack.c.l.b16 %v57
  %v244 = vunpack.c.l.b16 %v58
  %v245 = vunpack.c.l.b16 %v59
  %v246 = vunpack.c.l.b16 %v60
  %v247 = vunpack.c.l.b16 %v61
  %v248 = vunpack.c.l.b16 %v62
  %v249 = vunpack.c.l.b16 %v63
  %v250 = vunpack.c.l.b16 %v64
  %v251 = vunpack.c.l.b16 %v65
  %v252 = vpack.c.b16 %v234, %v233
  %v253 = vpack.c.b16 %v236, %v235
  %v254 = vpack.c.b16 %v238, %v237
  %v255 = vpack.c.b16 %v240, %v239
  %v256 = vpack.c.b16 %v242, %v241
  %v257 = vpack.c.b16 %v244, %v243
  %v258 = vpack.c.b16 %v246, %v245
  %v259 = vpack.c.b16 %v248, %v247
  %v260 = vpack.c.b16 %v250, %v249
  %v261 = vpack.c.b16 %v251, %v251
  %vm271 = vcmask 179200
  %v273 = vsel %vm271, %v167, 0
  %v276 = vsel %vm271, %v169, 0
  %v279 = vsel %vm271, %v171, 0
  %v282 = vsel %vm271, %v173, 0
  %v285 = vsel %vm271, %v175, 0
  %v288 = vsel %vm271, %v177, 0
  %v291 = vsel %vm271, %v179, 0
  %v294 = vsel %vm271, %v181, 0
  %v297 = vsel %vm271, %v183, 0
  %v300 = vsel %vm271, %v185, 0
  %v303 = vsel %vm271, %v187, 0
  %v306 = vsel %vm271, %v189, 0
  %v309 = vsel %vm271, %v191, 0
  %v312 = vsel %vm271, %v193, 0
  %v315 = vsel %vm271, %v195, 0
  %v318 = vsel %vm271, %v197, 0
  %vm320 = vcmask 1042432
  %v322 = vsel %vm320, %v261, 0
  %324 = vmatpush.bf16.msra.mxu0 %v259
  %325 = vmatpush.bf16.msra.mxu0 %v258
  %326 = vmatpush.bf16.msra.mxu0 %v257
  %327 = vmatpush.bf16.msra.mxu0 %v256
  %328 = vmatpush.bf16.msra.mxu0 %v255
  %329 = vmatpush.bf16.msra.mxu0 %v254
  %330 = vmatpush.bf16.msra.mxu0 %v253
  %331 = vmatpush.bf16.msra.mxu0 %v252
  %332 = vmatmul.bf16.gmra.mxu0 %v166
  %v333 = vpop.f32.mrf.mxu0
  %v334 = vadd.f32 %v68, %v333
  %v335 = vpop.f32.mrf.mxu0
  %v336 = vadd.f32 %v68, %v335
  %337 = vmatmul.bf16.gmra.mxu0 %v168
  %v338 = vpop.f32.mrf.mxu0
  %v339 = vadd.f32 %v68, %v338
  %v340 = vpop.f32.mrf.mxu0
  %v341 = vadd.f32 %v68, %v340
  %342 = vmatmul.bf16.gmra.mxu0 %v170
  %v343 = vpop.f32.mrf.mxu0
  %v344 = vadd.f32 %v68, %v343
  %v345 = vpop.f32.mrf.mxu0
  %v346 = vadd.f32 %v68, %v345
  %347 = vmatmul.bf16.gmra.mxu0 %v172
  %v348 = vpop.f32.mrf.mxu0
  %v349 = vadd.f32 %v68, %v348
  %v350 = vpop.f32.mrf.mxu0
  %v351 = vadd.f32 %v68, %v350
  %352 = vmatmul.bf16.gmra.mxu0 %v174
  %v353 = vpop.f32.mrf.mxu0
  %v354 = vadd.f32 %v68, %v353
  %v355 = vpop.f32.mrf.mxu0
  %v356 = vadd.f32 %v68, %v355
  %357 = vmatmul.bf16.gmra.mxu0 %v176
  %v358 = vpop.f32.mrf.mxu0
  %v359 = vadd.f32 %v68, %v358
  %v360 = vpop.f32.mrf.mxu0
  %v361 = vadd.f32 %v68, %v360
  %362 = vmatmul.bf16.gmra.mxu0 %v178
  %v363 = vpop.f32.mrf.mxu0
  %v364 = vadd.f32 %v68, %v363
  %v365 = vpop.f32.mrf.mxu0
  %v366 = vadd.f32 %v68, %v365
  %367 = vmatmul.bf16.gmra.mxu0 %v180
  %v368 = vpop.f32.mrf.mxu0
  %v369 = vadd.f32 %v68, %v368
  %v370 = vpop.f32.mrf.mxu0
  %v371 = vadd.f32 %v68, %v370
  %372 = vmatmul.bf16.gmra.mxu0 %v182
  %v373 = vpop.f32.mrf.mxu0
  %v374 = vadd.f32 %v68, %v373
  %v375 = vpop.f32.mrf.mxu0
  %v376 = vadd.f32 %v68, %v375
  %377 = vmatmul.bf16.gmra.mxu0 %v184
  %v378 = vpop.f32.mrf.mxu0
  %v379 = vadd.f32 %v68, %v378
  %v380 = vpop.f32.mrf.mxu0
  %v381 = vadd.f32 %v68, %v380
  %382 = vmatmul.bf16.gmra.mxu0 %v186
  %v383 = vpop.f32.mrf.mxu0
  %v384 = vadd.f32 %v68, %v383
  %v385 = vpop.f32.mrf.mxu0
  %v386 = vadd.f32 %v68, %v385
  %387 = vmatmul.bf16.gmra.mxu0 %v188
  %v388 = vpop.f32.mrf.mxu0
  %v389 = vadd.f32 %v68, %v388
  %v390 = vpop.f32.mrf.mxu0
  %v391 = vadd.f32 %v68, %v390
  %392 = vmatmul.bf16.gmra.mxu0 %v190
  %v393 = vpop.f32.mrf.mxu0
  %v394 = vadd.f32 %v68, %v393
  %v395 = vpop.f32.mrf.mxu0
  %v396 = vadd.f32 %v68, %v395
  %397 = vmatmul.bf16.gmra.mxu0 %v192
  %v398 = vpop.f32.mrf.mxu0
  %v399 = vadd.f32 %v68, %v398
  %v400 = vpop.f32.mrf.mxu0
  %v401 = vadd.f32 %v68, %v400
  %402 = vmatmul.bf16.gmra.mxu0 %v194
  %v403 = vpop.f32.mrf.mxu0
  %v404 = vadd.f32 %v68, %v403
  %v405 = vpop.f32.mrf.mxu0
  %v406 = vadd.f32 %v68, %v405
  %407 = vmatmul.bf16.gmra.mxu0 %v196
  %v408 = vpop.f32.mrf.mxu0
  %v409 = vadd.f32 %v68, %v408
  %v410 = vpop.f32.mrf.mxu0
  %v411 = vadd.f32 %v68, %v410
  %412 = vdwg.mxu0
  %413 = vmatpush.bf16.msra.mxu0 0
  %414 = vmatpush.bf16.msra.mxu0 0
  %415 = vmatpush.bf16.msra.mxu0 0
  %416 = vmatpush.bf16.msra.mxu0 0
  %417 = vmatpush.bf16.msra.mxu0 0
  %418 = vmatpush.bf16.msra.mxu0 0
  %419 = vmatpush.bf16.msra.mxu0 %v322
  %420 = vmatpush.bf16.msra.mxu0 %v260
  %421 = vmatmul.bf16.gmra.mxu0 %v273
  %v422 = vpop.f32.mrf.mxu0
  %v423 = vadd.f32 %v334, %v422
  %v424 = vpop.f32.mrf.mxu0
  %v425 = vadd.f32 %v336, %v424
  %426 = vmatmul.bf16.gmra.mxu0 %v276
  %v427 = vpop.f32.mrf.mxu0
  %v428 = vadd.f32 %v339, %v427
  %v429 = vpop.f32.mrf.mxu0
  %v430 = vadd.f32 %v341, %v429
  %431 = vmatmul.bf16.gmra.mxu0 %v279
  %v432 = vpop.f32.mrf.mxu0
  %v433 = vadd.f32 %v344, %v432
  %v434 = vpop.f32.mrf.mxu0
  %v435 = vadd.f32 %v346, %v434
  %436 = vmatmul.bf16.gmra.mxu0 %v282
  %v437 = vpop.f32.mrf.mxu0
  %v438 = vadd.f32 %v349, %v437
  %v439 = vpop.f32.mrf.mxu0
  %v440 = vadd.f32 %v351, %v439
  %441 = vmatmul.bf16.gmra.mxu0 %v285
  %v442 = vpop.f32.mrf.mxu0
  %v443 = vadd.f32 %v354, %v442
  %v444 = vpop.f32.mrf.mxu0
  %v445 = vadd.f32 %v356, %v444
  %446 = vmatmul.bf16.gmra.mxu0 %v288
  %v447 = vpop.f32.mrf.mxu0
  %v448 = vadd.f32 %v359, %v447
  %v449 = vpop.f32.mrf.mxu0
  %v450 = vadd.f32 %v361, %v449
  %451 = vmatmul.bf16.gmra.mxu0 %v291
  %v452 = vpop.f32.mrf.mxu0
  %v453 = vadd.f32 %v364, %v452
  %v454 = vpop.f32.mrf.mxu0
  %v455 = vadd.f32 %v366, %v454
  %456 = vmatmul.bf16.gmra.mxu0 %v294
  %v457 = vpop.f32.mrf.mxu0
  %v458 = vadd.f32 %v369, %v457
  %v459 = vpop.f32.mrf.mxu0
  %v460 = vadd.f32 %v371, %v459
  %461 = vmatmul.bf16.gmra.mxu0 %v297
  %v462 = vpop.f32.mrf.mxu0
  %v463 = vadd.f32 %v374, %v462
  %v464 = vpop.f32.mrf.mxu0
  %v465 = vadd.f32 %v376, %v464
  %466 = vmatmul.bf16.gmra.mxu0 %v300
  %v467 = vpop.f32.mrf.mxu0
  %v468 = vadd.f32 %v379, %v467
  %v469 = vpop.f32.mrf.mxu0
  %v470 = vadd.f32 %v381, %v469
  %471 = vmatmul.bf16.gmra.mxu0 %v303
  %v472 = vpop.f32.mrf.mxu0
  %v473 = vadd.f32 %v384, %v472
  %v474 = vpop.f32.mrf.mxu0
  %v475 = vadd.f32 %v386, %v474
  %476 = vmatmul.bf16.gmra.mxu0 %v306
  %v477 = vpop.f32.mrf.mxu0
  %v478 = vadd.f32 %v389, %v477
  %v479 = vpop.f32.mrf.mxu0
  %v480 = vadd.f32 %v391, %v479
  %481 = vmatmul.bf16.gmra.mxu0 %v309
  %v482 = vpop.f32.mrf.mxu0
  %v483 = vadd.f32 %v394, %v482
  %v484 = vpop.f32.mrf.mxu0
  %v485 = vadd.f32 %v396, %v484
  %486 = vmatmul.bf16.gmra.mxu0 %v312
  %v487 = vpop.f32.mrf.mxu0
  %v488 = vadd.f32 %v399, %v487
  %v489 = vpop.f32.mrf.mxu0
  %v490 = vadd.f32 %v401, %v489
  %491 = vmatmul.bf16.gmra.mxu0 %v315
  %v492 = vpop.f32.mrf.mxu0
  %v493 = vadd.f32 %v404, %v492
  %v494 = vpop.f32.mrf.mxu0
  %v495 = vadd.f32 %v406, %v494
  %496 = vmatmul.bf16.gmra.mxu0 %v318
  %v497 = vpop.f32.mrf.mxu0
  %v498 = vadd.f32 %v409, %v497
  %v499 = vpop.f32.mrf.mxu0
  %v500 = vadd.f32 %v411, %v499
  %501 = vdwg.mxu0
  %v502 = vtanh.pop %v423
  %v503 = vtanh.pop %v425
  %v504 = vtanh.pop %v428
  %v505 = vtanh.pop %v430
  %v506 = vtanh.pop %v433
  %v507 = vtanh.pop %v435
  %v508 = vtanh.pop %v438
  %v509 = vtanh.pop %v440
  %v510 = vtanh.pop %v443
  %v511 = vtanh.pop %v445
  %v512 = vtanh.pop %v448
  %v513 = vtanh.pop %v450
  %v514 = vtanh.pop %v453
  %v515 = vtanh.pop %v455
  %v516 = vtanh.pop %v458
  %v517 = vtanh.pop %v460
  %v518 = vtanh.pop %v463
  %v519 = vtanh.pop %v465
  %v520 = vtanh.pop %v468
  %v521 = vtanh.pop %v470
  %v522 = vtanh.pop %v473
  %v523 = vtanh.pop %v475
  %v524 = vtanh.pop %v478
  %v525 = vtanh.pop %v480
  %v526 = vtanh.pop %v483
  %v527 = vtanh.pop %v485
  %v528 = vtanh.pop %v488
  %v529 = vtanh.pop %v490
  %v530 = vtanh.pop %v493
  %v531 = vtanh.pop %v495
  %v532 = vtanh.pop %v498
  %v533 = vtanh.pop %v500
  %v534 = vadd.f32 %v502, %v510
  %v535 = vadd.f32 %v503, %v511
  %v536 = vadd.f32 %v504, %v512
  %v537 = vadd.f32 %v505, %v513
  %v538 = vadd.f32 %v506, %v514
  %v539 = vadd.f32 %v507, %v515
  %v540 = vadd.f32 %v508, %v516
  %v541 = vadd.f32 %v509, %v517
  %v542 = vadd.f32 %v534, %v518
  %v543 = vadd.f32 %v535, %v519
  %v544 = vadd.f32 %v536, %v520
  %v545 = vadd.f32 %v537, %v521
  %v546 = vadd.f32 %v538, %v522
  %v547 = vadd.f32 %v539, %v523
  %v548 = vadd.f32 %v540, %v524
  %v549 = vadd.f32 %v541, %v525
  %v550 = vadd.f32 %v542, %v526
  %v551 = vadd.f32 %v543, %v527
  %v552 = vadd.f32 %v544, %v528
  %v553 = vadd.f32 %v545, %v529
  %v554 = vadd.f32 %v546, %v530
  %v555 = vadd.f32 %v547, %v531
  %v556 = vadd.f32 %v548, %v532
  %v557 = vadd.f32 %v549, %v533
  %v558 = vmul.f32 %v550, 0.25
  %v559 = vmul.f32 %v551, 0.25
  %v560 = vmul.f32 %v552, 0.25
  %v561 = vmul.f32 %v553, 0.25
  %v562 = vmul.f32 %v554, 0.25
  %v563 = vmul.f32 %v555, 0.25
  %v564 = vmul.f32 %v556, 0.25
  %v565 = vmul.f32 %v557, 0.25
  %v566 = vpack.c.bf16 %v558, %v558
  %v567 = vpack.c.bf16 %v559, %v559
  %v568 = vpack.c.bf16 %v560, %v560
  %v569 = vpack.c.bf16 %v561, %v561
  %v570 = vpack.c.bf16 %v562, %v562
  %v571 = vpack.c.bf16 %v563, %v563
  %v572 = vpack.c.bf16 %v564, %v564
  %v573 = vpack.c.bf16 %v565, %v565
  %574 = vst [vmem:[%s3] sm:$0xf] %v566
  %575 = vst [vmem:[%s3 + $0x4] sm:$0xf] %v567
  %576 = vst [vmem:[%s3 + $0x8] sm:$0xf] %v568
  %577 = vst [vmem:[%s3 + $0xc] sm:$0xf] %v569
  %578 = vst [vmem:[%s3 + $0x10] sm:$0xf] %v570
  %579 = vst [vmem:[%s3 + $0x14] sm:$0xf] %v571
  %580 = vst [vmem:[%s3 + $0x18] sm:$0xf] %v572
  %581 = vst [vmem:[%s3 + $0x1c] sm:$0xf] %v573
  // Predicated region
  $region14: #{lenet_forward.4} parent=0 // pred_check
    _
  $region15: #{lenet_forward.4} parent=0 // pred_check_branch
    %583 = sbr.rel (0) target = $region17
  $region16: #{lenet_forward.4} parent=0 // pred_region
    _
  $region17: #{lenet_forward.4} parent=0 // pred_fallthru
    _
  // Predicated region
  $region18: #{lenet_forward.4} parent=0 // pred_check
    _
  $region19: #{lenet_forward.4} parent=0 // pred_check_branch
    %585 = sbr.rel (0) target = $region21
  $region20: #{lenet_forward.4} parent=0 // pred_region
    _
  $region21: #{lenet_forward.4} parent=0 // pred_fallthru
    _

// kernel: lenet_forward.5
$region0: #{lenet_forward.5}
  #allocation0 [shape = 'u32[]', space=smem, size = 0x4, offset = 0x4, fixed_abs, tag = 'smem constant byte address 0x4 - core index']
  #allocation1 [shape = 'u32[72,128]{1,0:T(1,128)}', space=vmem, size = 0x9000, scoped, tag = 'internal scratch']
  %s0 = inlined_call_operand.vmem [shape: bf16[16,400], index: 0, kind: input, shape index: {}]
  %s1 = inlined_call_operand.vmem [shape: bf16[400,128], index: 1, kind: input, shape index: {}]
  %s2 = inlined_call_operand.vmem [shape: f32[1,128], index: 2, kind: input, shape index: {}]
  %s3 = inlined_call_operand.vmem [shape: bf16[128,128], index: 3, kind: input, shape index: {}]
  %s4 = inlined_call_operand.vmem [shape: f32[1,128], index: 4, kind: input, shape index: {}]
  %s5 = inlined_call_operand.vmem [shape: bf16[128,128], index: 5, kind: input, shape index: {}]
  %s6 = inlined_call_operand.vmem [shape: f32[1,128], index: 6, kind: input, shape index: {}]
  %s7 = inlined_call_operand.vmem [shape: f32[16,128], index: 7, kind: output, shape index: {}]
  %s8 = sld [smem:[#allocation0]]
  $region38: #{lenet_forward.5} parent=0
    _
  %s10 = ssub.s32 1, %s8
  %s11 = scalar_select 0, %s10, %s8
  // Predicated region
  $region2: #{lenet_forward.5} parent=0 // pred_check
    _
  $region3: #{lenet_forward.5} parent=0 // pred_check_branch
    %13 = sbr.rel (0) target = $region5
  $region4: #{lenet_forward.5} parent=0 // pred_region
    _
  $region5: #{lenet_forward.5} parent=0 // pred_fallthru
    _
  // Predicated region
  $region6: #{lenet_forward.5} parent=0 // pred_check
    _
  $region7: #{lenet_forward.5} parent=0 // pred_check_branch
    %15 = sbr.rel (0) target = $region9
  $region8: #{lenet_forward.5} parent=0 // pred_region
    _
  $region9: #{lenet_forward.5} parent=0 // pred_fallthru
    _
  // Predicated region
  $region10: #{lenet_forward.5} parent=0 // pred_check
    _
  $region11: #{lenet_forward.5} parent=0 // pred_check_branch
    %17 = sbr.rel (0) target = $region13
  $region12: #{lenet_forward.5} parent=0 // pred_region
    _
  $region13: #{lenet_forward.5} parent=0 // pred_fallthru
    _
  // Predicated region
  $region14: #{lenet_forward.5} parent=0 // pred_check
    _
  $region15: #{lenet_forward.5} parent=0 // pred_check_branch
    %19 = sbr.rel (0) target = $region17
  $region16: #{lenet_forward.5} parent=0 // pred_region
    _
  $region17: #{lenet_forward.5} parent=0 // pred_fallthru
    _
  // Predicated region
  $region18: #{lenet_forward.5} parent=0 // pred_check
    _
  $region19: #{lenet_forward.5} parent=0 // pred_check_branch
    %21 = sbr.rel (0) target = $region21
  $region20: #{lenet_forward.5} parent=0 // pred_region
    _
  $region21: #{lenet_forward.5} parent=0 // pred_fallthru
    _
  // Predicated region
  $region22: #{lenet_forward.5} parent=0 // pred_check
    _
  $region23: #{lenet_forward.5} parent=0 // pred_check_branch
    %23 = sbr.rel (0) target = $region25
  $region24: #{lenet_forward.5} parent=0 // pred_region
    _
  $region25: #{lenet_forward.5} parent=0 // pred_fallthru
    _
  // Predicated region
  $region26: #{lenet_forward.5} parent=0 // pred_check
    _
  $region27: #{lenet_forward.5} parent=0 // pred_check_branch
    %25 = sbr.rel (0) target = $region29
  $region28: #{lenet_forward.5} parent=0 // pred_region
    _
  $region29: #{lenet_forward.5} parent=0 // pred_fallthru
    _
  %v27 = vld [vmem:[%s0] sm:$0xff]
  %v28 = vld [vmem:[%s0 + $0x8] sm:$0xff]
  %v29 = vld [vmem:[%s0 + $0x10] sm:$0xff]
  %v30 = vld [vmem:[%s0 + $0x18] sm:$0xff]
  %v31 = vld [vmem:[%s1] sm:$0xf]
  %v32 = vld [vmem:[%s1 + $0x4] sm:$0xf]
  %v33 = vld [vmem:[%s1 + $0x8] sm:$0xf]
  %v34 = vld [vmem:[%s1 + $0xc] sm:$0xf]
  %v35 = vld [vmem:[%s1 + $0x10] sm:$0xf]
  %v36 = vld [vmem:[%s1 + $0x14] sm:$0xf]
  %v37 = vld [vmem:[%s1 + $0x18] sm:$0xf]
  %v38 = vld [vmem:[%s1 + $0x1c] sm:$0xf]
  %v39 = vld [vmem:[%s1 + $0x20] sm:$0xf]
  %v40 = vld [vmem:[%s1 + $0x24] sm:$0xf]
  %v41 = vld [vmem:[%s1 + $0x28] sm:$0xf]
  %v42 = vld [vmem:[%s1 + $0x2c] sm:$0xf]
  %v43 = vld [vmem:[%s1 + $0x30] sm:$0xf]
  %v44 = vld [vmem:[%s1 + $0x34] sm:$0xf]
  %v45 = vld [vmem:[%s1 + $0x38] sm:$0xf]
  %v46 = vld [vmem:[%s1 + $0x3c] sm:$0xf]
  %v47 = vld [vmem:[%s1 + $0x40] sm:$0xf]
  %v48 = vld [vmem:[%s1 + $0x44] sm:$0xf]
  %v49 = vld [vmem:[%s1 + $0x48] sm:$0xf]
  %v50 = vld [vmem:[%s1 + $0x4c] sm:$0xf]
  %v51 = vld [vmem:[%s1 + $0x50] sm:$0xf]
  %v52 = vld [vmem:[%s1 + $0x54] sm:$0xf]
  %v53 = vld [vmem:[%s1 + $0x58] sm:$0xf]
  %v54 = vld [vmem:[%s1 + $0x5c] sm:$0xf]
  %v55 = vld [vmem:[%s1 + $0x60] sm:$0xf]
  %v56 = vld [vmem:[%s1 + $0x64] sm:$0xf]
  %v57 = vld [vmem:[%s1 + $0x68] sm:$0xf]
  %v58 = vld [vmem:[%s1 + $0x6c] sm:$0xf]
  %v59 = vld [vmem:[%s1 + $0x70] sm:$0xf]
  %v60 = vld [vmem:[%s1 + $0x74] sm:$0xf]
  %v61 = vld [vmem:[%s1 + $0x78] sm:$0xf]
  %v62 = vld [vmem:[%s1 + $0x7c] sm:$0xf]
  %v63 = vld [vmem:[%s1 + $0x80] sm:$0xf]
  %v64 = vld [vmem:[%s1 + $0x84] sm:$0xf]
  %v65 = vld [vmem:[%s1 + $0x88] sm:$0xf]
  %v66 = vld [vmem:[%s1 + $0x8c] sm:$0xf]
  %v67 = vld [vmem:[%s1 + $0x90] sm:$0xf]
  %v68 = vld [vmem:[%s1 + $0x94] sm:$0xf]
  %v69 = vld [vmem:[%s1 + $0x98] sm:$0xf]
  %v70 = vld [vmem:[%s1 + $0x9c] sm:$0xf]
  %v71 = vld [vmem:[%s1 + $0xa0] sm:$0xf]
  %v72 = vld [vmem:[%s1 + $0xa4] sm:$0xf]
  %v73 = vld [vmem:[%s1 + $0xa8] sm:$0xf]
  %v74 = vld [vmem:[%s1 + $0xac] sm:$0xf]
  %v75 = vld [vmem:[%s1 + $0xb0] sm:$0xf]
  %v76 = vld [vmem:[%s1 + $0xb4] sm:$0xf]
  %v77 = vld [vmem:[%s1 + $0xb8] sm:$0xf]
  %v78 = vld [vmem:[%s1 + $0xbc] sm:$0xf]
  %v79 = vld [vmem:[%s1 + $0xc0] sm:$0xf]
  %v80 = vld [vmem:[%s1 + $0xc4] sm:$0xf]
  %v81 = vld [vmem:[%s2] sm:$0x1]
  %v83 = vperm.slane %v81, 0
  %v89 = vunpack.c.l.b16 %v27
  %v90 = vunpack.c.h.b16 %v27
  %v91 = vunpack.c.l.b16 %v28
  %v92 = vunpack.c.h.b16 %v28
  %v93 = vunpack.c.l.b16 %v29
  %v94 = vunpack.c.h.b16 %v29
  %v95 = vunpack.c.l.b16 %v30
  %v96 = vunpack.c.h.b16 %v30
  %v97 = vpack.c.b16 %v93, %v89
  %v98 = vpack.c.b16 %v94, %v90
  %v99 = vpack.c.b16 %v95, %v91
  %v100 = vpack.c.b16 %v96, %v92
  %v154 = vunpack.c.l.b16 %v31
  %v155 = vunpack.c.l.b16 %v32
  %v156 = vunpack.c.l.b16 %v33
  %v157 = vunpack.c.l.b16 %v34
  %v158 = vunpack.c.l.b16 %v35
  %v159 = vunpack.c.l.b16 %v36
  %v160 = vunpack.c.l.b16 %v37
  %v161 = vunpack.c.l.b16 %v38
  %v162 = vunpack.c.l.b16 %v39
  %v163 = vunpack.c.l.b16 %v40
  %v164 = vunpack.c.l.b16 %v41
  %v165 = vunpack.c.l.b16 %v42
  %v166 = vunpack.c.l.b16 %v43
  %v167 = vunpack.c.l.b16 %v44
  %v168 = vunpack.c.l.b16 %v45
  %v169 = vunpack.c.l.b16 %v46
  %v170 = vunpack.c.l.b16 %v47
  %v171 = vunpack.c.l.b16 %v48
  %v172 = vunpack.c.l.b16 %v49
  %v173 = vunpack.c.l.b16 %v50
  %v174 = vunpack.c.l.b16 %v51
  %v175 = vunpack.c.l.b16 %v52
  %v176 = vunpack.c.l.b16 %v53
  %v177 = vunpack.c.l.b16 %v54
  %v178 = vunpack.c.l.b16 %v55
  %v179 = vunpack.c.l.b16 %v56
  %v180 = vunpack.c.l.b16 %v57
  %v181 = vunpack.c.l.b16 %v58
  %v182 = vunpack.c.l.b16 %v59
  %v183 = vunpack.c.l.b16 %v60
  %v184 = vunpack.c.l.b16 %v61
  %v185 = vunpack.c.l.b16 %v62
  %v186 = vunpack.c.l.b16 %v63
  %v187 = vunpack.c.l.b16 %v64
  %v188 = vunpack.c.l.b16 %v65
  %v189 = vunpack.c.l.b16 %v66
  %v190 = vunpack.c.l.b16 %v67
  %v191 = vunpack.c.l.b16 %v68
  %v192 = vunpack.c.l.b16 %v69
  %v193 = vunpack.c.l.b16 %v70
  %v194 = vunpack.c.l.b16 %v71
  %v195 = vunpack.c.l.b16 %v72
  %v196 = vunpack.c.l.b16 %v73
  %v197 = vunpack.c.l.b16 %v74
  %v198 = vunpack.c.l.b16 %v75
  %v199 = vunpack.c.l.b16 %v76
  %v200 = vunpack.c.l.b16 %v77
  %v201 = vunpack.c.l.b16 %v78
  %v202 = vunpack.c.l.b16 %v79
  %v203 = vunpack.c.l.b16 %v80
  %v204 = vpack.c.b16 %v155, %v154
  %v205 = vpack.c.b16 %v157, %v156
  %v206 = vpack.c.b16 %v159, %v158
  %v207 = vpack.c.b16 %v161, %v160
  %v208 = vpack.c.b16 %v163, %v162
  %v209 = vpack.c.b16 %v165, %v164
  %v210 = vpack.c.b16 %v167, %v166
  %v211 = vpack.c.b16 %v169, %v168
  %v212 = vpack.c.b16 %v171, %v170
  %v213 = vpack.c.b16 %v173, %v172
  %v214 = vpack.c.b16 %v175, %v174
  %v215 = vpack.c.b16 %v177, %v176
  %v216 = vpack.c.b16 %v179, %v178
  %v217 = vpack.c.b16 %v181, %v180
  %v218 = vpack.c.b16 %v183, %v182
  %v219 = vpack.c.b16 %v185, %v184
  %v220 = vpack.c.b16 %v187, %v186
  %v221 = vpack.c.b16 %v189, %v188
  %v222 = vpack.c.b16 %v191, %v190
  %v223 = vpack.c.b16 %v193, %v192
  %v224 = vpack.c.b16 %v195, %v194
  %v225 = vpack.c.b16 %v197, %v196
  %v226 = vpack.c.b16 %v199, %v198
  %v227 = vpack.c.b16 %v201, %v200
  %v228 = vpack.c.b16 %v203, %v202
  %vm254 = vcmask 130048
  %v256 = vsel %vm254, %v100, 0
  %258 = vmatpush.bf16.msra.mxu0 %v211
  %259 = vmatpush.bf16.msra.mxu0 %v210
  %260 = vmatpush.bf16.msra.mxu0 %v209
  %261 = vmatpush.bf16.msra.mxu0 %v208
  %262 = vmatpush.bf16.msra.mxu0 %v207
  %263 = vmatpush.bf16.msra.mxu0 %v206
  %264 = vmatpush.bf16.msra.mxu0 %v205
  %265 = vmatpush.bf16.msra.mxu0 %v204
  %266 = vmatmul.bf16.gmra.mxu0 %v97
  %v267 = vpop.f32.mrf.mxu0
  %v268 = vadd.f32 %v83, %v267
  %v269 = vpop.f32.mrf.mxu0
  %v270 = vadd.f32 %v83, %v269
  %271 = vdwg.mxu0
  %272 = vmatpush.bf16.msra.mxu0 %v219
  %273 = vmatpush.bf16.msra.mxu0 %v218
  %274 = vmatpush.bf16.msra.mxu0 %v217
  %275 = vmatpush.bf16.msra.mxu0 %v216
  %276 = vmatpush.bf16.msra.mxu0 %v215
  %277 = vmatpush.bf16.msra.mxu0 %v214
  %278 = vmatpush.bf16.msra.mxu0 %v213
  %279 = vmatpush.bf16.msra.mxu0 %v212
  %280 = vmatmul.bf16.gmra.mxu0 %v98
  %v281 = vpop.f32.mrf.mxu0
  %v282 = vadd.f32 %v268, %v281
  %v283 = vpop.f32.mrf.mxu0
  %v284 = vadd.f32 %v270, %v283
  %285 = vdwg.mxu0
  %286 = vmatpush.bf16.msra.mxu0 %v227
  %287 = vmatpush.bf16.msra.mxu0 %v226
  %288 = vmatpush.bf16.msra.mxu0 %v225
  %289 = vmatpush.bf16.msra.mxu0 %v224
  %290 = vmatpush.bf16.msra.mxu0 %v223
  %291 = vmatpush.bf16.msra.mxu0 %v222
  %292 = vmatpush.bf16.msra.mxu0 %v221
  %293 = vmatpush.bf16.msra.mxu0 %v220
  %294 = vmatmul.bf16.gmra.mxu0 %v99
  %v295 = vpop.f32.mrf.mxu0
  %v296 = vadd.f32 %v282, %v295
  %v297 = vpop.f32.mrf.mxu0
  %v298 = vadd.f32 %v284, %v297
  %299 = vdwg.mxu0
  %300 = vmatpush.bf16.msra.mxu0 0
  %301 = vmatpush.bf16.msra.mxu0 0
  %302 = vmatpush.bf16.msra.mxu0 0
  %303 = vmatpush.bf16.msra.mxu0 0
  %304 = vmatpush.bf16.msra.mxu0 0
  %305 = vmatpush.bf16.msra.mxu0 0
  %306 = vmatpush.bf16.msra.mxu0 0
  %307 = vmatpush.bf16.msra.mxu0 %v228
  %308 = vmatmul.bf16.gmra.mxu0 %v256
  %v309 = vpop.f32.mrf.mxu0
  %v310 = vadd.f32 %v296, %v309
  %v311 = vpop.f32.mrf.mxu0
  %v312 = vadd.f32 %v298, %v311
  %313 = vdwg.mxu0
  %v314 = vtanh.pop %v310
  %v315 = vtanh.pop %v312
  %v316 = vpack.c.bf16 %v315, %v314
  %v317 = vld [vmem:[%s3] sm:$0xf]
  %v318 = vld [vmem:[%s3 + $0x4] sm:$0xf]
  %v319 = vld [vmem:[%s3 + $0x8] sm:$0xf]
  %v320 = vld [vmem:[%s3 + $0xc] sm:$0xf]
  %v321 = vld [vmem:[%s3 + $0x10] sm:$0xf]
  %v322 = vld [vmem:[%s3 + $0x14] sm:$0xf]
  %v323 = vld [vmem:[%s3 + $0x18] sm:$0xf]
  %v324 = vld [vmem:[%s3 + $0x1c] sm:$0xf]
  %v325 = vld [vmem:[%s3 + $0x20] sm:$0xf]
  %v326 = vld [vmem:[%s3 + $0x24] sm:$0xf]
  %v327 = vld [vmem:[%s3 + $0x28] sm:$0xf]
  %v328 = vld [vmem:[%s3 + $0x2c] sm:$0xf]
  %v329 = vld [vmem:[%s3 + $0x30] sm:$0xf]
  %v330 = vld [vmem:[%s3 + $0x34] sm:$0xf]
  %v331 = vld [vmem:[%s3 + $0x38] sm:$0xf]
  %v332 = vld [vmem:[%s3 + $0x3c] sm:$0xf]
  %v333 = vld [vmem:[%s4] sm:$0x1]
  %v335 = vperm.slane %v333, 0
  %v353 = vunpack.c.l.b16 %v317
  %v354 = vunpack.c.l.b16 %v318
  %v355 = vunpack.c.l.b16 %v319
  %v356 = vunpack.c.l.b16 %v320
  %v357 = vunpack.c.l.b16 %v321
  %v358 = vunpack.c.l.b16 %v322
  %v359 = vunpack.c.l.b16 %v323
  %v360 = vunpack.c.l.b16 %v324
  %v361 = vunpack.c.l.b16 %v325
  %v362 = vunpack.c.l.b16 %v326
  %v363 = vunpack.c.l.b16 %v327
  %v364 = vunpack.c.l.b16 %v328
  %v365 = vunpack.c.l.b16 %v329
  %v366 = vunpack.c.l.b16 %v330
  %v367 = vunpack.c.l.b16 %v331
  %v368 = vunpack.c.l.b16 %v332
  %v369 = vpack.c.b16 %v354, %v353
  %v370 = vpack.c.b16 %v356, %v355
  %v371 = vpack.c.b16 %v358, %v357
  %v372 = vpack.c.b16 %v360, %v359
  %v373 = vpack.c.b16 %v362, %v361
  %v374 = vpack.c.b16 %v364, %v363
  %v375 = vpack.c.b16 %v366, %v365
  %v376 = vpack.c.b16 %v368, %v367
  %385 = vmatpush.bf16.msra.mxu0 %v376
  %386 = vmatpush.bf16.msra.mxu0 %v375
  %387 = vmatpush.bf16.msra.mxu0 %v374
  %388 = vmatpush.bf16.msra.mxu0 %v373
  %389 = vmatpush.bf16.msra.mxu0 %v372
  %390 = vmatpush.bf16.msra.mxu0 %v371
  %391 = vmatpush.bf16.msra.mxu0 %v370
  %392 = vmatpush.bf16.msra.mxu0 %v369
  %393 = vmatmul.bf16.gmra.mxu0 %v316
  %v394 = vpop.f32.mrf.mxu0
  %v395 = vadd.f32 %v335, %v394
  %v396 = vpop.f32.mrf.mxu0
  %v397 = vadd.f32 %v335, %v396
  %398 = vdwg.mxu0
  %v399 = vtanh.pop %v395
  %v400 = vtanh.pop %v397
  %v401 = vpack.c.bf16 %v400, %v399
  %v402 = vld [vmem:[%s5] sm:$0xf]
  %v403 = vld [vmem:[%s5 + $0x4] sm:$0xf]
  %v404 = vld [vmem:[%s5 + $0x8] sm:$0xf]
  %v405 = vld [vmem:[%s5 + $0xc] sm:$0xf]
  %v406 = vld [vmem:[%s5 + $0x10] sm:$0xf]
  %v407 = vld [vmem:[%s5 + $0x14] sm:$0xf]
  %v408 = vld [vmem:[%s5 + $0x18] sm:$0xf]
  %v409 = vld [vmem:[%s5 + $0x1c] sm:$0xf]
  %v410 = vld [vmem:[%s5 + $0x20] sm:$0xf]
  %v411 = vld [vmem:[%s5 + $0x24] sm:$0xf]
  %v412 = vld [vmem:[%s5 + $0x28] sm:$0xf]
  %v413 = vld [vmem:[%s5 + $0x2c] sm:$0xf]
  %v414 = vld [vmem:[%s5 + $0x30] sm:$0xf]
  %v415 = vld [vmem:[%s5 + $0x34] sm:$0xf]
  %v416 = vld [vmem:[%s5 + $0x38] sm:$0xf]
  %v417 = vld [vmem:[%s5 + $0x3c] sm:$0xf]
  %v418 = vld [vmem:[%s6] sm:$0x1]
  %v420 = vperm.slane %v418, 0
  %v438 = vunpack.c.l.b16 %v402
  %v439 = vunpack.c.l.b16 %v403
  %v440 = vunpack.c.l.b16 %v404
  %v441 = vunpack.c.l.b16 %v405
  %v442 = vunpack.c.l.b16 %v406
  %v443 = vunpack.c.l.b16 %v407
  %v444 = vunpack.c.l.b16 %v408
  %v445 = vunpack.c.l.b16 %v409
  %v446 = vunpack.c.l.b16 %v410
  %v447 = vunpack.c.l.b16 %v411
  %v448 = vunpack.c.l.b16 %v412
  %v449 = vunpack.c.l.b16 %v413
  %v450 = vunpack.c.l.b16 %v414
  %v451 = vunpack.c.l.b16 %v415
  %v452 = vunpack.c.l.b16 %v416
  %v453 = vunpack.c.l.b16 %v417
  %v454 = vpack.c.b16 %v439, %v438
  %v455 = vpack.c.b16 %v441, %v440
  %v456 = vpack.c.b16 %v443, %v442
  %v457 = vpack.c.b16 %v445, %v444
  %v458 = vpack.c.b16 %v447, %v446
  %v459 = vpack.c.b16 %v449, %v448
  %v460 = vpack.c.b16 %v451, %v450
  %v461 = vpack.c.b16 %v453, %v452
  %470 = vmatpush.bf16.msra.mxu0 %v461
  %471 = vmatpush.bf16.msra.mxu0 %v460
  %472 = vmatpush.bf16.msra.mxu0 %v459
  %473 = vmatpush.bf16.msra.mxu0 %v458
  %474 = vmatpush.bf16.msra.mxu0 %v457
  %475 = vmatpush.bf16.msra.mxu0 %v456
  %476 = vmatpush.bf16.msra.mxu0 %v455
  %477 = vmatpush.bf16.msra.mxu0 %v454
  %478 = vmatmul.bf16.gmra.mxu0 %v401
  %v479 = vpop.f32.mrf.mxu0
  %v480 = vadd.f32 %v420, %v479
  %v481 = vpop.f32.mrf.mxu0
  %v482 = vadd.f32 %v420, %v481
  %483 = vdwg.mxu0
  %484 = vst [vmem:[%s7] sm:$0xff] %v480
  %485 = vst [vmem:[%s7 + $0x8] sm:$0xff] %v482
  // Predicated region
  $region30: #{lenet_forward.5} parent=0 // pred_check
    _
  $region31: #{lenet_forward.5} parent=0 // pred_check_branch
    %487 = sbr.rel (0) target = $region33
  $region32: #{lenet_forward.5} parent=0 // pred_region
    _
  $region33: #{lenet_forward.5} parent=0 // pred_fallthru
    _
  // Predicated region
  $region34: #{lenet_forward.5} parent=0 // pred_check
    _
  $region35: #{lenet_forward.5} parent=0 // pred_check_branch
    %489 = sbr.rel (0) target = $region37
  $region36: #{lenet_forward.5} parent=0 // pred_region
    _
  $region37: #{lenet_forward.5} parent=0 // pred_fallthru
    _

</llo_original>
